<compile_context>
chip_gen: v7x
topology: tpu7x:2x2x1
jax: 0.10.0
libtpu: 0.0.40
codegen_flags: <defaults>
</compile_context>

<pallas_src>
import functools

import jax
import jax.numpy as jnp
from jax import lax
from jax.experimental import pallas as pl
from jax.experimental.pallas import tpu as pltpu

EPS = 1e-5


def _fuse_w(w):
    # (3, Cout, Cin) -> (Cout, 3*Cin), tap-major column blocks [x[t-1] | x[t] | x[t+1]]
    return jnp.transpose(w, (1, 0, 2)).reshape(w.shape[1], 3 * w.shape[2])


def _col(v):
    # (1, C, 1) -> (C, 1)
    return v.reshape(v.shape[1], 1)


def _block_kernel(lok_ref, rok_ref, pool_ref, expand_ref,
                  x_ref,
                  bn1_g, bn1_b, w1_ref,
                  bn2_g, bn2_b, w2_ref,
                  bn3_g, bn3_b, w3_ref,
                  scw_ref, scbn_g, scbn_b,
                  se_w1, se_b1, se_w2, se_b2,
                  out_ref, *, nl):
    inv_nl = 1.0 / float(nl)
    lok = lok_ref[...]      # (1, N*L) — zero where the x[t-1] tap crosses a batch edge
    rok = rok_ref[...]      # (1, N*L) — zero where the x[t+1] tap crosses a batch edge

    def conv3(t, w):
        # One MXU matmul covers all 3 taps and the whole batch.
        tl = pltpu.roll(t, shift=1, axis=1) * lok          # x[t-1]
        tr = pltpu.roll(t, shift=nl - 1, axis=1) * rok     # x[t+1]
        rhs = jnp.concatenate([tl, t, tr], axis=0)         # (3*Cin, N*L)
        return jnp.dot(w, rhs, preferred_element_type=jnp.float32)

    def bn_relu(t, g, b, relu=True):
        # Training-mode BatchNorm1d with folded affine: t*scale + shift.
        mu = jnp.sum(t, axis=1, keepdims=True) * inv_nl
        ex2 = jnp.sum(t * t, axis=1, keepdims=True) * inv_nl
        var = ex2 - mu * mu
        scale = g[...] * lax.rsqrt(var + EPS)
        shift = b[...] - mu * scale
        y = t * scale + shift
        return jnp.maximum(y, 0.0) if relu else y

    # --- pre-activation stack: (bn -> relu -> conv) x 3, values kept in vregs ---
    x = x_ref[...]
    t = conv3(bn_relu(x, bn1_g, bn1_b), w1_ref[...])
    t = conv3(bn_relu(t, bn2_g, bn2_b), w2_ref[...])
    t = conv3(bn_relu(t, bn3_g, bn3_b), w3_ref[...])

    # --- shortcut: 1x1 conv (no bias) + BN ---
    res = jnp.dot(scw_ref[...], x, preferred_element_type=jnp.float32)
    res = bn_relu(res, scbn_g, scbn_b, relu=False)

    out = t + res

    # --- squeeze-and-excite gate (pool/expand matrices precomputed in the wrapper) ---
    y = jnp.dot(out, pool_ref[...], preferred_element_type=jnp.float32)        # (P, N)
    h = jnp.maximum(
        jnp.dot(se_w1[...], y, preferred_element_type=jnp.float32) + se_b1[...], 0.0)
    z = jnp.dot(se_w2[...], h, preferred_element_type=jnp.float32) + se_b2[...]
    gate = 1.0 / (1.0 + jnp.exp(-z))                                            # (P, N)
    gate_full = jnp.dot(gate, expand_ref[...], preferred_element_type=jnp.float32)

    out_ref[...] = out * gate_full + res


def basic_block_1d_slab(x_slab, p, n, l):
    """Slab-layout entry point: x_slab is (Cin, N*L); returns (planes, N*L)."""
    cin, nl = x_slab.shape
    assert nl == n * l
    assert nl % 128 == 0, "lane dim (N*L) must be a multiple of 128 for lane-dense slabs"
    planes = p["w1"].shape[1]
    c4 = p["se_w1"].shape[0]

    # Constant helper slabs built once outside the kernel (no iota / % / // inside).
    pos = jnp.arange(nl, dtype=jnp.int32) % l
    left_ok = (pos != 0).astype(jnp.float32)[None, :]          # (1, N*L)
    right_ok = (pos != l - 1).astype(jnp.float32)[None, :]     # (1, N*L)
    seg = jnp.arange(nl, dtype=jnp.int32) // l
    bid = jnp.arange(n, dtype=jnp.int32)
    pool = (seg[:, None] == bid[None, :]).astype(jnp.float32) * (1.0 / l)   # (N*L, N)
    expand = (bid[:, None] == seg[None, :]).astype(jnp.float32)             # (N, N*L)

    args = (left_ok, right_ok, pool, expand,
            x_slab,
            _col(p["bn1_g"]), _col(p["bn1_b"]), _fuse_w(p["w1"]),
            _col(p["bn2_g"]), _col(p["bn2_b"]), _fuse_w(p["w2"]),
            _col(p["bn3_g"]), _col(p["bn3_b"]), _fuse_w(p["w3"]),
            p["sc_w"][0], _col(p["scbn_g"]), _col(p["scbn_b"]),
            p["se_w1"], p["se_b1"], p["se_w2"], p["se_b2"])

    # Advisory cost estimate (dominant matmul flops + elementwise) + VMEM budget.
    mm_flops = (2 * nl * (planes * 3 * cin + 2 * planes * 3 * planes + planes * cin)
                + 2 * nl * planes * n * 2
                + 2 * n * (c4 * planes + planes * c4))
    ew_flops = nl * (8 * cin + 8 * 3 * planes + 6 * planes)
    bytes_accessed = 4 * (sum(int(a.size) for a in args) + planes * nl)
    vmem_bytes = min(max(8 * bytes_accessed + (2 << 20), 16 << 20), 48 << 20)

    vmem = pl.BlockSpec(memory_space=pltpu.MemorySpace.VMEM)
    return pl.pallas_call(
        functools.partial(_block_kernel, nl=nl),
        out_shape=jax.ShapeDtypeStruct((planes, nl), jnp.float32),
        in_specs=[vmem] * len(args),
        out_specs=vmem,
        cost_estimate=pl.CostEstimate(
            flops=int(mm_flops + ew_flops),
            transcendentals=int(planes * n + cin + 4 * planes),
            bytes_accessed=int(bytes_accessed)),
        compiler_params=pltpu.CompilerParams(vmem_limit_bytes=int(vmem_bytes)),
    )(*args)


def basic_block_1d(x, p):
    """PyTorch-layout (N, C, L) wrapper. For chains of blocks, prefer
    basic_block_1d_slab and keep activations in (C, N*L) slab layout to avoid the
    two HBM relayouts per block."""
    n, cin, l = x.shape
    planes = p["w1"].shape[1]
    x_slab = jnp.transpose(x, (1, 0, 2)).reshape(cin, n * l)
    out_slab = basic_block_1d_slab(x_slab, p, n, l)
    return jnp.transpose(out_slab.reshape(planes, n, l), (1, 0, 2))


def reference(x, p):
    """Pure-JAX reference with identical math (for correctness check)."""
    def bn(t, g, b):
        mu = t.mean(axis=(0, 2), keepdims=True)
        var = ((t - mu) ** 2).mean(axis=(0, 2), keepdims=True)
        return (t - mu) / jnp.sqrt(var + EPS) * g + b

    def conv3(t, w):  # w: (3, Cout, Cin), pad=1, stride=1
        l = t.shape[2]
        tp = jnp.pad(t, ((0, 0), (0, 0), (1, 1)))
        return sum(jnp.einsum("oi,nil->nol", w[k], tp[:, :, k:k + l]) for k in range(3))

    t = jax.nn.relu(bn(x, p["bn1_g"], p["bn1_b"]))
    t = conv3(t, p["w1"])
    t = jax.nn.relu(bn(t, p["bn2_g"], p["bn2_b"]))
    t = conv3(t, p["w2"])
    t = jax.nn.relu(bn(t, p["bn3_g"], p["bn3_b"]))
    t = conv3(t, p["w3"])
    res = bn(jnp.einsum("oi,nil->nol", p["sc_w"][0], x), p["scbn_g"], p["scbn_b"])
    out = t + res
    y = out.mean(axis=2)                                             # (N, P)
    h = jax.nn.relu(jnp.einsum("oc,nc->no", p["se_w1"], y) + p["se_b1"][:, 0])
    gate = jax.nn.sigmoid(jnp.einsum("oc,nc->no", p["se_w2"], h) + p["se_b2"][:, 0])
    return out * gate[:, :, None] + res


if __name__ == "__main__":
    # L chosen so that N*L (=256) is a multiple of 128 -> lane-dense stores / rolls.
    N, INPLANES, PLANES, L = 2, 8, 16, 128
    C4 = PLANES // 4

    keys = jax.random.split(jax.random.PRNGKey(0), 17)
    nrm = lambda k, s, scale=1.0: scale * jax.random.normal(k, s, jnp.float32)

    params = {
        "bn1_g": 1.0 + nrm(keys[0], (1, INPLANES, 1), 0.1),
        "bn1_b": nrm(keys[1], (1, INPLANES, 1), 0.1),
        "w1":    nrm(keys[2], (3, PLANES, INPLANES), 0.2),
        "bn2_g": 1.0 + nrm(keys[3], (1, PLANES, 1), 0.1),
        "bn2_b": nrm(keys[4], (1, PLANES, 1), 0.1),
        "w2":    nrm(keys[5], (3, PLANES, PLANES), 0.15),
        "bn3_g": 1.0 + nrm(keys[6], (1, PLANES, 1), 0.1),
        "bn3_b": nrm(keys[7], (1, PLANES, 1), 0.1),
        "w3":    nrm(keys[8], (3, PLANES, PLANES), 0.15),
        "sc_w":  nrm(keys[9], (1, PLANES, INPLANES), 0.2),
        "scbn_g": 1.0 + nrm(keys[10], (1, PLANES, 1), 0.1),
        "scbn_b": nrm(keys[11], (1, PLANES, 1), 0.1),
        "se_w1": nrm(keys[12], (C4, PLANES), 0.2),   # torch Linear(planes, planes//4).weight
        "se_b1": nrm(keys[13], (C4, 1), 0.1),
        "se_w2": nrm(keys[14], (PLANES, C4), 0.2),   # torch Linear(planes//4, planes).weight
        "se_b2": nrm(keys[15], (PLANES, 1), 0.1),
    }
    x = nrm(keys[16], (N, INPLANES, L))

    out = jax.block_until_ready(basic_block_1d(x, params))

    ref = reference(x, params)
    assert out.shape == (N, PLANES, L), out.shape
    assert jnp.allclose(out, ref, atol=1e-4, rtol=1e-4), (
        "mismatch vs reference: max abs err %g" % float(jnp.max(jnp.abs(out - ref))))

    print("KERNEL_OK")
</pallas_src>

<mosaic_0001>
module attributes {stable_mosaic.version = 11 : i64} {
  func.func @_block_kernel(%arg0: memref<1x256xf32, #tpu.memory_space<vmem>>, %arg1: memref<1x256xf32, #tpu.memory_space<vmem>>, %arg2: memref<256x2xf32, #tpu.memory_space<vmem>>, %arg3: memref<2x256xf32, #tpu.memory_space<vmem>>, %arg4: memref<8x256xf32, #tpu.memory_space<vmem>>, %arg5: memref<8x1xf32, #tpu.memory_space<vmem>>, %arg6: memref<8x1xf32, #tpu.memory_space<vmem>>, %arg7: memref<16x24xf32, #tpu.memory_space<vmem>>, %arg8: memref<16x1xf32, #tpu.memory_space<vmem>>, %arg9: memref<16x1xf32, #tpu.memory_space<vmem>>, %arg10: memref<16x48xf32, #tpu.memory_space<vmem>>, %arg11: memref<16x1xf32, #tpu.memory_space<vmem>>, %arg12: memref<16x1xf32, #tpu.memory_space<vmem>>, %arg13: memref<16x48xf32, #tpu.memory_space<vmem>>, %arg14: memref<16x8xf32, #tpu.memory_space<vmem>>, %arg15: memref<16x1xf32, #tpu.memory_space<vmem>>, %arg16: memref<16x1xf32, #tpu.memory_space<vmem>>, %arg17: memref<4x16xf32, #tpu.memory_space<vmem>>, %arg18: memref<4x1xf32, #tpu.memory_space<vmem>>, %arg19: memref<16x4xf32, #tpu.memory_space<vmem>>, %arg20: memref<16x1xf32, #tpu.memory_space<vmem>>, %arg21: memref<16x256xf32, #tpu.memory_space<vmem>>) attributes {dimension_semantics = [], scalar_prefetch = 0 : i64, scratch_operands = 0 : i64, tpu.core_type = #tpu.core_type<tc>} {
    %c0 = arith.constant 0 : index
    %c0_0 = arith.constant 0 : index
    %0 = vector.load %arg0[%c0, %c0_0] : memref<1x256xf32, #tpu.memory_space<vmem>>, vector<1x256xf32>
    %c0_1 = arith.constant 0 : index
    %c0_2 = arith.constant 0 : index
    %1 = vector.load %arg1[%c0_1, %c0_2] : memref<1x256xf32, #tpu.memory_space<vmem>>, vector<1x256xf32>
    %c0_3 = arith.constant 0 : index
    %c0_4 = arith.constant 0 : index
    %2 = vector.load %arg4[%c0_3, %c0_4] : memref<8x256xf32, #tpu.memory_space<vmem>>, vector<8x256xf32>
    %cst = arith.constant dense<0.000000e+00> : vector<8xf32>
    %3 = vector.multi_reduction <add>, %2, %cst [1] : vector<8x256xf32> to vector<8xf32>
    %4 = vector.shape_cast %3 : vector<8xf32> to vector<8x1xf32>
    %cst_5 = arith.constant 3.906250e-03 : f32
    %5 = vector.broadcast %cst_5 : f32 to vector<8x1xf32>
    %6 = arith.mulf %4, %5 : vector<8x1xf32>
    %7 = arith.mulf %2, %2 : vector<8x256xf32>
    %cst_6 = arith.constant dense<0.000000e+00> : vector<8xf32>
    %8 = vector.multi_reduction <add>, %7, %cst_6 [1] : vector<8x256xf32> to vector<8xf32>
    %9 = vector.shape_cast %8 : vector<8xf32> to vector<8x1xf32>
    %cst_7 = arith.constant 3.906250e-03 : f32
    %10 = vector.broadcast %cst_7 : f32 to vector<8x1xf32>
    %11 = arith.mulf %9, %10 : vector<8x1xf32>
    %12 = arith.mulf %6, %6 : vector<8x1xf32>
    %13 = arith.subf %11, %12 : vector<8x1xf32>
    %c0_8 = arith.constant 0 : index
    %c0_9 = arith.constant 0 : index
    %14 = vector.load %arg5[%c0_8, %c0_9] : memref<8x1xf32, #tpu.memory_space<vmem>>, vector<8x1xf32>
    %cst_10 = arith.constant 9.99999974E-6 : f32
    %15 = vector.broadcast %cst_10 : f32 to vector<8x1xf32>
    %16 = arith.addf %13, %15 : vector<8x1xf32>
    %17 = math.rsqrt %16 : vector<8x1xf32>
    %18 = arith.mulf %14, %17 : vector<8x1xf32>
    %c0_11 = arith.constant 0 : index
    %c0_12 = arith.constant 0 : index
    %19 = vector.load %arg6[%c0_11, %c0_12] : memref<8x1xf32, #tpu.memory_space<vmem>>, vector<8x1xf32>
    %20 = arith.mulf %6, %18 : vector<8x1xf32>
    %21 = arith.subf %19, %20 : vector<8x1xf32>
    %22 = vector.broadcast %18 : vector<8x1xf32> to vector<8x256xf32>
    %23 = arith.mulf %2, %22 : vector<8x256xf32>
    %24 = vector.broadcast %21 : vector<8x1xf32> to vector<8x256xf32>
    %25 = arith.addf %23, %24 : vector<8x256xf32>
    %cst_13 = arith.constant 0.000000e+00 : f32
    %26 = vector.broadcast %cst_13 : f32 to vector<8x256xf32>
    %27 = arith.maximumf %25, %26 : vector<8x256xf32>
    %c0_14 = arith.constant 0 : index
    %c0_15 = arith.constant 0 : index
    %28 = vector.load %arg7[%c0_14, %c0_15] : memref<16x24xf32, #tpu.memory_space<vmem>>, vector<16x24xf32>
    %c1_i32 = arith.constant 1 : i32
    %29 = tpu.dynamic_rotate %27 by %c1_i32 dim 1 : vector<8x256xf32>, i32 -> vector<8x256xf32>
    %30 = vector.broadcast %0 : vector<1x256xf32> to vector<8x256xf32>
    %31 = arith.mulf %29, %30 : vector<8x256xf32>
    %c255_i32 = arith.constant 255 : i32
    %32 = tpu.dynamic_rotate %27 by %c255_i32 dim 1 : vector<8x256xf32>, i32 -> vector<8x256xf32>
    %33 = vector.broadcast %1 : vector<1x256xf32> to vector<8x256xf32>
    %34 = arith.mulf %32, %33 : vector<8x256xf32>
    %35 = tpu.concatenate %31, %27, %34 in 0 : vector<8x256xf32>, vector<8x256xf32>, vector<8x256xf32> -> vector<24x256xf32>
    %cst_16 = arith.constant dense<0.000000e+00> : vector<16x256xf32>
    %36 = tpu.matmul %28, %35, %cst_16 {dimension_numbers = #tpu.dot_dimension_numbers<[1], [0], [0], [1], [0, 0, 1, 1], [], []>} : vector<16x24xf32>, vector<24x256xf32>, vector<16x256xf32> -> vector<16x256xf32>
    %cst_17 = arith.constant dense<0.000000e+00> : vector<16xf32>
    %37 = vector.multi_reduction <add>, %36, %cst_17 [1] : vector<16x256xf32> to vector<16xf32>
    %38 = vector.shape_cast %37 : vector<16xf32> to vector<16x1xf32>
    %cst_18 = arith.constant 3.906250e-03 : f32
    %39 = vector.broadcast %cst_18 : f32 to vector<16x1xf32>
    %40 = arith.mulf %38, %39 : vector<16x1xf32>
    %41 = arith.mulf %36, %36 : vector<16x256xf32>
    %cst_19 = arith.constant dense<0.000000e+00> : vector<16xf32>
    %42 = vector.multi_reduction <add>, %41, %cst_19 [1] : vector<16x256xf32> to vector<16xf32>
    %43 = vector.shape_cast %42 : vector<16xf32> to vector<16x1xf32>
    %cst_20 = arith.constant 3.906250e-03 : f32
    %44 = vector.broadcast %cst_20 : f32 to vector<16x1xf32>
    %45 = arith.mulf %43, %44 : vector<16x1xf32>
    %46 = arith.mulf %40, %40 : vector<16x1xf32>
    %47 = arith.subf %45, %46 : vector<16x1xf32>
    %c0_21 = arith.constant 0 : index
    %c0_22 = arith.constant 0 : index
    %48 = vector.load %arg8[%c0_21, %c0_22] : memref<16x1xf32, #tpu.memory_space<vmem>>, vector<16x1xf32>
    %cst_23 = arith.constant 9.99999974E-6 : f32
    %49 = vector.broadcast %cst_23 : f32 to vector<16x1xf32>
    %50 = arith.addf %47, %49 : vector<16x1xf32>
    %51 = math.rsqrt %50 : vector<16x1xf32>
    %52 = arith.mulf %48, %51 : vector<16x1xf32>
    %c0_24 = arith.constant 0 : index
    %c0_25 = arith.constant 0 : index
    %53 = vector.load %arg9[%c0_24, %c0_25] : memref<16x1xf32, #tpu.memory_space<vmem>>, vector<16x1xf32>
    %54 = arith.mulf %40, %52 : vector<16x1xf32>
    %55 = arith.subf %53, %54 : vector<16x1xf32>
    %56 = vector.broadcast %52 : vector<16x1xf32> to vector<16x256xf32>
    %57 = arith.mulf %36, %56 : vector<16x256xf32>
    %58 = vector.broadcast %55 : vector<16x1xf32> to vector<16x256xf32>
    %59 = arith.addf %57, %58 : vector<16x256xf32>
    %cst_26 = arith.constant 0.000000e+00 : f32
    %60 = vector.broadcast %cst_26 : f32 to vector<16x256xf32>
    %61 = arith.maximumf %59, %60 : vector<16x256xf32>
    %c0_27 = arith.constant 0 : index
    %c0_28 = arith.constant 0 : index
    %62 = vector.load %arg10[%c0_27, %c0_28] : memref<16x48xf32, #tpu.memory_space<vmem>>, vector<16x48xf32>
    %c1_i32_29 = arith.constant 1 : i32
    %63 = tpu.dynamic_rotate %61 by %c1_i32_29 dim 1 : vector<16x256xf32>, i32 -> vector<16x256xf32>
    %64 = vector.broadcast %0 : vector<1x256xf32> to vector<16x256xf32>
    %65 = arith.mulf %63, %64 : vector<16x256xf32>
    %c255_i32_30 = arith.constant 255 : i32
    %66 = tpu.dynamic_rotate %61 by %c255_i32_30 dim 1 : vector<16x256xf32>, i32 -> vector<16x256xf32>
    %67 = vector.broadcast %1 : vector<1x256xf32> to vector<16x256xf32>
    %68 = arith.mulf %66, %67 : vector<16x256xf32>
    %69 = tpu.concatenate %65, %61, %68 in 0 : vector<16x256xf32>, vector<16x256xf32>, vector<16x256xf32> -> vector<48x256xf32>
    %cst_31 = arith.constant dense<0.000000e+00> : vector<16x256xf32>
    %70 = tpu.matmul %62, %69, %cst_31 {dimension_numbers = #tpu.dot_dimension_numbers<[1], [0], [0], [1], [0, 0, 1, 1], [], []>} : vector<16x48xf32>, vector<48x256xf32>, vector<16x256xf32> -> vector<16x256xf32>
    %cst_32 = arith.constant dense<0.000000e+00> : vector<16xf32>
    %71 = vector.multi_reduction <add>, %70, %cst_32 [1] : vector<16x256xf32> to vector<16xf32>
    %72 = vector.shape_cast %71 : vector<16xf32> to vector<16x1xf32>
    %cst_33 = arith.constant 3.906250e-03 : f32
    %73 = vector.broadcast %cst_33 : f32 to vector<16x1xf32>
    %74 = arith.mulf %72, %73 : vector<16x1xf32>
    %75 = arith.mulf %70, %70 : vector<16x256xf32>
    %cst_34 = arith.constant dense<0.000000e+00> : vector<16xf32>
    %76 = vector.multi_reduction <add>, %75, %cst_34 [1] : vector<16x256xf32> to vector<16xf32>
    %77 = vector.shape_cast %76 : vector<16xf32> to vector<16x1xf32>
    %cst_35 = arith.constant 3.906250e-03 : f32
    %78 = vector.broadcast %cst_35 : f32 to vector<16x1xf32>
    %79 = arith.mulf %77, %78 : vector<16x1xf32>
    %80 = arith.mulf %74, %74 : vector<16x1xf32>
    %81 = arith.subf %79, %80 : vector<16x1xf32>
    %c0_36 = arith.constant 0 : index
    %c0_37 = arith.constant 0 : index
    %82 = vector.load %arg11[%c0_36, %c0_37] : memref<16x1xf32, #tpu.memory_space<vmem>>, vector<16x1xf32>
    %cst_38 = arith.constant 9.99999974E-6 : f32
    %83 = vector.broadcast %cst_38 : f32 to vector<16x1xf32>
    %84 = arith.addf %81, %83 : vector<16x1xf32>
    %85 = math.rsqrt %84 : vector<16x1xf32>
    %86 = arith.mulf %82, %85 : vector<16x1xf32>
    %c0_39 = arith.constant 0 : index
    %c0_40 = arith.constant 0 : index
    %87 = vector.load %arg12[%c0_39, %c0_40] : memref<16x1xf32, #tpu.memory_space<vmem>>, vector<16x1xf32>
    %88 = arith.mulf %74, %86 : vector<16x1xf32>
    %89 = arith.subf %87, %88 : vector<16x1xf32>
    %90 = vector.broadcast %86 : vector<16x1xf32> to vector<16x256xf32>
    %91 = arith.mulf %70, %90 : vector<16x256xf32>
    %92 = vector.broadcast %89 : vector<16x1xf32> to vector<16x256xf32>
    %93 = arith.addf %91, %92 : vector<16x256xf32>
    %cst_41 = arith.constant 0.000000e+00 : f32
    %94 = vector.broadcast %cst_41 : f32 to vector<16x256xf32>
    %95 = arith.maximumf %93, %94 : vector<16x256xf32>
    %c0_42 = arith.constant 0 : index
    %c0_43 = arith.constant 0 : index
    %96 = vector.load %arg13[%c0_42, %c0_43] : memref<16x48xf32, #tpu.memory_space<vmem>>, vector<16x48xf32>
    %c1_i32_44 = arith.constant 1 : i32
    %97 = tpu.dynamic_rotate %95 by %c1_i32_44 dim 1 : vector<16x256xf32>, i32 -> vector<16x256xf32>
    %98 = vector.broadcast %0 : vector<1x256xf32> to vector<16x256xf32>
    %99 = arith.mulf %97, %98 : vector<16x256xf32>
    %c255_i32_45 = arith.constant 255 : i32
    %100 = tpu.dynamic_rotate %95 by %c255_i32_45 dim 1 : vector<16x256xf32>, i32 -> vector<16x256xf32>
    %101 = vector.broadcast %1 : vector<1x256xf32> to vector<16x256xf32>
    %102 = arith.mulf %100, %101 : vector<16x256xf32>
    %103 = tpu.concatenate %99, %95, %102 in 0 : vector<16x256xf32>, vector<16x256xf32>, vector<16x256xf32> -> vector<48x256xf32>
    %cst_46 = arith.constant dense<0.000000e+00> : vector<16x256xf32>
    %104 = tpu.matmul %96, %103, %cst_46 {dimension_numbers = #tpu.dot_dimension_numbers<[1], [0], [0], [1], [0, 0, 1, 1], [], []>} : vector<16x48xf32>, vector<48x256xf32>, vector<16x256xf32> -> vector<16x256xf32>
    %c0_47 = arith.constant 0 : index
    %c0_48 = arith.constant 0 : index
    %105 = vector.load %arg14[%c0_47, %c0_48] : memref<16x8xf32, #tpu.memory_space<vmem>>, vector<16x8xf32>
    %cst_49 = arith.constant dense<0.000000e+00> : vector<16x256xf32>
    %106 = tpu.matmul %105, %2, %cst_49 {dimension_numbers = #tpu.dot_dimension_numbers<[1], [0], [0], [1], [0, 0, 1, 1], [], []>} : vector<16x8xf32>, vector<8x256xf32>, vector<16x256xf32> -> vector<16x256xf32>
    %cst_50 = arith.constant dense<0.000000e+00> : vector<16xf32>
    %107 = vector.multi_reduction <add>, %106, %cst_50 [1] : vector<16x256xf32> to vector<16xf32>
    %108 = vector.shape_cast %107 : vector<16xf32> to vector<16x1xf32>
    %cst_51 = arith.constant 3.906250e-03 : f32
    %109 = vector.broadcast %cst_51 : f32 to vector<16x1xf32>
    %110 = arith.mulf %108, %109 : vector<16x1xf32>
    %111 = arith.mulf %106, %106 : vector<16x256xf32>
    %cst_52 = arith.constant dense<0.000000e+00> : vector<16xf32>
    %112 = vector.multi_reduction <add>, %111, %cst_52 [1] : vector<16x256xf32> to vector<16xf32>
    %113 = vector.shape_cast %112 : vector<16xf32> to vector<16x1xf32>
    %cst_53 = arith.constant 3.906250e-03 : f32
    %114 = vector.broadcast %cst_53 : f32 to vector<16x1xf32>
    %115 = arith.mulf %113, %114 : vector<16x1xf32>
    %116 = arith.mulf %110, %110 : vector<16x1xf32>
    %117 = arith.subf %115, %116 : vector<16x1xf32>
    %c0_54 = arith.constant 0 : index
    %c0_55 = arith.constant 0 : index
    %118 = vector.load %arg15[%c0_54, %c0_55] : memref<16x1xf32, #tpu.memory_space<vmem>>, vector<16x1xf32>
    %cst_56 = arith.constant 9.99999974E-6 : f32
    %119 = vector.broadcast %cst_56 : f32 to vector<16x1xf32>
    %120 = arith.addf %117, %119 : vector<16x1xf32>
    %121 = math.rsqrt %120 : vector<16x1xf32>
    %122 = arith.mulf %118, %121 : vector<16x1xf32>
    %c0_57 = arith.constant 0 : index
    %c0_58 = arith.constant 0 : index
    %123 = vector.load %arg16[%c0_57, %c0_58] : memref<16x1xf32, #tpu.memory_space<vmem>>, vector<16x1xf32>
    %124 = arith.mulf %110, %122 : vector<16x1xf32>
    %125 = arith.subf %123, %124 : vector<16x1xf32>
    %126 = vector.broadcast %122 : vector<16x1xf32> to vector<16x256xf32>
    %127 = arith.mulf %106, %126 : vector<16x256xf32>
    %128 = vector.broadcast %125 : vector<16x1xf32> to vector<16x256xf32>
    %129 = arith.addf %127, %128 : vector<16x256xf32>
    %130 = arith.addf %104, %129 : vector<16x256xf32>
    %c0_59 = arith.constant 0 : index
    %c0_60 = arith.constant 0 : index
    %131 = vector.load %arg2[%c0_59, %c0_60] : memref<256x2xf32, #tpu.memory_space<vmem>>, vector<256x2xf32>
    %cst_61 = arith.constant dense<0.000000e+00> : vector<16x2xf32>
    %132 = tpu.matmul %130, %131, %cst_61 {dimension_numbers = #tpu.dot_dimension_numbers<[1], [0], [0], [1], [0, 0, 1, 1], [], []>} : vector<16x256xf32>, vector<256x2xf32>, vector<16x2xf32> -> vector<16x2xf32>
    %c0_62 = arith.constant 0 : index
    %c0_63 = arith.constant 0 : index
    %133 = vector.load %arg17[%c0_62, %c0_63] : memref<4x16xf32, #tpu.memory_space<vmem>>, vector<4x16xf32>
    %cst_64 = arith.constant dense<0.000000e+00> : vector<4x2xf32>
    %134 = tpu.matmul %133, %132, %cst_64 {dimension_numbers = #tpu.dot_dimension_numbers<[1], [0], [0], [1], [0, 0, 1, 1], [], []>} : vector<4x16xf32>, vector<16x2xf32>, vector<4x2xf32> -> vector<4x2xf32>
    %c0_65 = arith.constant 0 : index
    %c0_66 = arith.constant 0 : index
    %135 = vector.load %arg18[%c0_65, %c0_66] : memref<4x1xf32, #tpu.memory_space<vmem>>, vector<4x1xf32>
    %136 = vector.broadcast %135 : vector<4x1xf32> to vector<4x2xf32>
    %137 = arith.addf %134, %136 : vector<4x2xf32>
    %cst_67 = arith.constant 0.000000e+00 : f32
    %138 = vector.broadcast %cst_67 : f32 to vector<4x2xf32>
    %139 = arith.maximumf %137, %138 : vector<4x2xf32>
    %c0_68 = arith.constant 0 : index
    %c0_69 = arith.constant 0 : index
    %140 = vector.load %arg19[%c0_68, %c0_69] : memref<16x4xf32, #tpu.memory_space<vmem>>, vector<16x4xf32>
    %cst_70 = arith.constant dense<0.000000e+00> : vector<16x2xf32>
    %141 = tpu.matmul %140, %139, %cst_70 {dimension_numbers = #tpu.dot_dimension_numbers<[1], [0], [0], [1], [0, 0, 1, 1], [], []>} : vector<16x4xf32>, vector<4x2xf32>, vector<16x2xf32> -> vector<16x2xf32>
    %c0_71 = arith.constant 0 : index
    %c0_72 = arith.constant 0 : index
    %142 = vector.load %arg20[%c0_71, %c0_72] : memref<16x1xf32, #tpu.memory_space<vmem>>, vector<16x1xf32>
    %143 = vector.broadcast %142 : vector<16x1xf32> to vector<16x2xf32>
    %144 = arith.addf %141, %143 : vector<16x2xf32>
    %cst_73 = arith.constant 0.000000e+00 : f32
    %145 = vector.broadcast %cst_73 : f32 to vector<16x2xf32>
    %146 = arith.subf %145, %144 : vector<16x2xf32>
    %147 = math.exp %146 : vector<16x2xf32>
    %cst_74 = arith.constant 1.000000e+00 : f32
    %148 = vector.broadcast %cst_74 : f32 to vector<16x2xf32>
    %149 = arith.addf %148, %147 : vector<16x2xf32>
    %cst_75 = arith.constant 1.000000e+00 : f32
    %150 = vector.broadcast %cst_75 : f32 to vector<16x2xf32>
    %151 = arith.divf %150, %149 : vector<16x2xf32>
    %c0_76 = arith.constant 0 : index
    %c0_77 = arith.constant 0 : index
    %152 = vector.load %arg3[%c0_76, %c0_77] : memref<2x256xf32, #tpu.memory_space<vmem>>, vector<2x256xf32>
    %cst_78 = arith.constant dense<0.000000e+00> : vector<16x256xf32>
    %153 = tpu.matmul %151, %152, %cst_78 {dimension_numbers = #tpu.dot_dimension_numbers<[1], [0], [0], [1], [0, 0, 1, 1], [], []>} : vector<16x2xf32>, vector<2x256xf32>, vector<16x256xf32> -> vector<16x256xf32>
    %154 = arith.mulf %130, %153 : vector<16x256xf32>
    %155 = arith.addf %154, %129 : vector<16x256xf32>
    %c0_79 = arith.constant 0 : index
    %c0_80 = arith.constant 0 : index
    %156 = vector.load %arg21[%c0_79, %c0_80] : memref<16x256xf32, #tpu.memory_space<vmem>>, vector<16x256xf32>
    tpu.vector_store %arg21[%c0_79, %c0_80], %155 {strides = array<i32>} : memref<16x256xf32, #tpu.memory_space<vmem>>, vector<16x256xf32>,
    return
  }
}

</mosaic_0001>

<llo_original>
// kernel: tpu_custom_call.1
$region0: #{tpu_custom_call.1}
  #allocation0 [shape = 'u32[]', space=smem, size = 0x4, offset = 0x4, fixed_abs, tag = 'smem constant byte address 0x4 - core index']
  #allocation1 [shape = 'u32[144,128]{1,0:T(1,128)}', space=vmem, size = 0x12000, scoped, tag = 'internal scratch']
  %s0 = inlined_call_operand.vmem [shape: f32[1,256], index: 0, kind: input, shape index: {}]
  %s1 = inlined_call_operand.vmem [shape: f32[1,256], index: 1, kind: input, shape index: {}]
  %s2 = inlined_call_operand.vmem [shape: f32[256,2], index: 2, kind: input, shape index: {}]
  %s3 = inlined_call_operand.vmem [shape: f32[2,256], index: 3, kind: input, shape index: {}]
  %s4 = inlined_call_operand.vmem [shape: f32[8,256], index: 4, kind: input, shape index: {}]
  %s5 = inlined_call_operand.vmem [shape: f32[8,1], index: 5, kind: input, shape index: {}]
  %s6 = inlined_call_operand.vmem [shape: f32[8,1], index: 6, kind: input, shape index: {}]
  %s7 = inlined_call_operand.vmem [shape: f32[16,24], index: 7, kind: input, shape index: {}]
  %s8 = inlined_call_operand.vmem [shape: f32[16,1], index: 8, kind: input, shape index: {}]
  %s9 = inlined_call_operand.vmem [shape: f32[16,1], index: 9, kind: input, shape index: {}]
  %s10 = inlined_call_operand.vmem [shape: f32[16,48], index: 10, kind: input, shape index: {}]
  %s11 = inlined_call_operand.vmem [shape: f32[16,1], index: 11, kind: input, shape index: {}]
  %s12 = inlined_call_operand.vmem [shape: f32[16,1], index: 12, kind: input, shape index: {}]
  %s13 = inlined_call_operand.vmem [shape: f32[16,48], index: 13, kind: input, shape index: {}]
  %s14 = inlined_call_operand.vmem [shape: f32[16,8], index: 14, kind: input, shape index: {}]
  %s15 = inlined_call_operand.vmem [shape: f32[16,1], index: 15, kind: input, shape index: {}]
  %s16 = inlined_call_operand.vmem [shape: f32[16,1], index: 16, kind: input, shape index: {}]
  %s17 = inlined_call_operand.vmem [shape: f32[4,16], index: 17, kind: input, shape index: {}]
  %s18 = inlined_call_operand.vmem [shape: f32[4,1], index: 18, kind: input, shape index: {}]
  %s19 = inlined_call_operand.vmem [shape: f32[16,4], index: 19, kind: input, shape index: {}]
  %s20 = inlined_call_operand.vmem [shape: f32[16,1], index: 20, kind: input, shape index: {}]
  %s21 = inlined_call_operand.hbm [shape: f32[16,256], index: 21, kind: output, shape index: {}]
  %s22 = sld [smem:[#allocation0]]
  $region94: #{tpu_custom_call.1} parent=0
    _
  %s24 = ssub.s32 1, %s22
  %s25 = scalar_select 0, %s24, %s22
  $region1: #{tpu_custom_call.1} parent=0
    #allocation2 [shape = 'u8[16384]{0}', space=vmem, size = 0x4000, scoped, tag = 'output window, operand 0, single buffered']
    #allocation3 [shape = 's32[1]{0}', space=sflag, size = 0x4, scoped, tag = 'scoped memory for tpu_custom_call.1']
    %26 = vsyncpa [#allocation3], 0
    // Predicated region
    $region2: #{tpu_custom_call.1} parent=1 // pred_check
      _
    $region3: #{tpu_custom_call.1} parent=1 // pred_check_branch
      %28 = sbr.rel (0) target = $region5
    $region4: #{tpu_custom_call.1} parent=1 // pred_region
      _
    $region5: #{tpu_custom_call.1} parent=1 // pred_fallthru
      _
    // Predicated region
    $region6: #{tpu_custom_call.1} parent=1 // pred_check
      _
    $region7: #{tpu_custom_call.1} parent=1 // pred_check_branch
      %30 = sbr.rel (0) target = $region9
    $region8: #{tpu_custom_call.1} parent=1 // pred_region
      _
    $region9: #{tpu_custom_call.1} parent=1 // pred_fallthru
      _
    // Predicated region
    $region10: #{tpu_custom_call.1} parent=1 // pred_check
      _
    $region11: #{tpu_custom_call.1} parent=1 // pred_check_branch
      %32 = sbr.rel (0) target = $region13
    $region12: #{tpu_custom_call.1} parent=1 // pred_region
      _
    $region13: #{tpu_custom_call.1} parent=1 // pred_fallthru
      _
    // Predicated region
    $region14: #{tpu_custom_call.1} parent=1 // pred_check
      _
    $region15: #{tpu_custom_call.1} parent=1 // pred_check_branch
      %34 = sbr.rel (0) target = $region17
    $region16: #{tpu_custom_call.1} parent=1 // pred_region
      _
    $region17: #{tpu_custom_call.1} parent=1 // pred_fallthru
      _
    // Predicated region
    $region18: #{tpu_custom_call.1} parent=1 // pred_check
      _
    $region19: #{tpu_custom_call.1} parent=1 // pred_check_branch
      %36 = sbr.rel (0) target = $region21
    $region20: #{tpu_custom_call.1} parent=1 // pred_region
      _
    $region21: #{tpu_custom_call.1} parent=1 // pred_fallthru
      _
    // Predicated region
    $region22: #{tpu_custom_call.1} parent=1 // pred_check
      _
    $region23: #{tpu_custom_call.1} parent=1 // pred_check_branch
      %38 = sbr.rel (0) target = $region25
    $region24: #{tpu_custom_call.1} parent=1 // pred_region
      _
    $region25: #{tpu_custom_call.1} parent=1 // pred_fallthru
      _
    // Predicated region
    $region26: #{tpu_custom_call.1} parent=1 // pred_check
      _
    $region27: #{tpu_custom_call.1} parent=1 // pred_check_branch
      %40 = sbr.rel (0) target = $region29
    $region28: #{tpu_custom_call.1} parent=1 // pred_region
      _
    $region29: #{tpu_custom_call.1} parent=1 // pred_fallthru
      _
    // Predicated region
    $region30: #{tpu_custom_call.1} parent=1 // pred_check
      _
    $region31: #{tpu_custom_call.1} parent=1 // pred_check_branch
      %42 = sbr.rel (0) target = $region33
    $region32: #{tpu_custom_call.1} parent=1 // pred_region
      _
    $region33: #{tpu_custom_call.1} parent=1 // pred_fallthru
      _
    // Predicated region
    $region34: #{tpu_custom_call.1} parent=1 // pred_check
      _
    $region35: #{tpu_custom_call.1} parent=1 // pred_check_branch
      %44 = sbr.rel (0) target = $region37
    $region36: #{tpu_custom_call.1} parent=1 // pred_region
      _
    $region37: #{tpu_custom_call.1} parent=1 // pred_fallthru
      _
    // Predicated region
    $region38: #{tpu_custom_call.1} parent=1 // pred_check
      _
    $region39: #{tpu_custom_call.1} parent=1 // pred_check_branch
      %46 = sbr.rel (0) target = $region41
    $region40: #{tpu_custom_call.1} parent=1 // pred_region
      _
    $region41: #{tpu_custom_call.1} parent=1 // pred_fallthru
      _
    // Predicated region
    $region42: #{tpu_custom_call.1} parent=1 // pred_check
      _
    $region43: #{tpu_custom_call.1} parent=1 // pred_check_branch
      %48 = sbr.rel (0) target = $region45
    $region44: #{tpu_custom_call.1} parent=1 // pred_region
      _
    $region45: #{tpu_custom_call.1} parent=1 // pred_fallthru
      _
    // Predicated region
    $region46: #{tpu_custom_call.1} parent=1 // pred_check
      _
    $region47: #{tpu_custom_call.1} parent=1 // pred_check_branch
      %50 = sbr.rel (0) target = $region49
    $region48: #{tpu_custom_call.1} parent=1 // pred_region
      _
    $region49: #{tpu_custom_call.1} parent=1 // pred_fallthru
      _
    // Predicated region
    $region50: #{tpu_custom_call.1} parent=1 // pred_check
      _
    $region51: #{tpu_custom_call.1} parent=1 // pred_check_branch
      %52 = sbr.rel (0) target = $region53
    $region52: #{tpu_custom_call.1} parent=1 // pred_region
      _
    $region53: #{tpu_custom_call.1} parent=1 // pred_fallthru
      _
    // Predicated region
    $region54: #{tpu_custom_call.1} parent=1 // pred_check
      _
    $region55: #{tpu_custom_call.1} parent=1 // pred_check_branch
      %54 = sbr.rel (0) target = $region57
    $region56: #{tpu_custom_call.1} parent=1 // pred_region
      _
    $region57: #{tpu_custom_call.1} parent=1 // pred_fallthru
      _
    // Predicated region
    $region58: #{tpu_custom_call.1} parent=1 // pred_check
      _
    $region59: #{tpu_custom_call.1} parent=1 // pred_check_branch
      %56 = sbr.rel (0) target = $region61
    $region60: #{tpu_custom_call.1} parent=1 // pred_region
      _
    $region61: #{tpu_custom_call.1} parent=1 // pred_fallthru
      _
    // Predicated region
    $region62: #{tpu_custom_call.1} parent=1 // pred_check
      _
    $region63: #{tpu_custom_call.1} parent=1 // pred_check_branch
      %58 = sbr.rel (0) target = $region65
    $region64: #{tpu_custom_call.1} parent=1 // pred_region
      _
    $region65: #{tpu_custom_call.1} parent=1 // pred_fallthru
      _
    // Predicated region
    $region66: #{tpu_custom_call.1} parent=1 // pred_check
      _
    $region67: #{tpu_custom_call.1} parent=1 // pred_check_branch
      %60 = sbr.rel (0) target = $region69
    $region68: #{tpu_custom_call.1} parent=1 // pred_region
      _
    $region69: #{tpu_custom_call.1} parent=1 // pred_fallthru
      _
    // Predicated region
    $region70: #{tpu_custom_call.1} parent=1 // pred_check
      _
    $region71: #{tpu_custom_call.1} parent=1 // pred_check_branch
      %62 = sbr.rel (0) target = $region73
    $region72: #{tpu_custom_call.1} parent=1 // pred_region
      _
    $region73: #{tpu_custom_call.1} parent=1 // pred_fallthru
      _
    // Predicated region
    $region74: #{tpu_custom_call.1} parent=1 // pred_check
      _
    $region75: #{tpu_custom_call.1} parent=1 // pred_check_branch
      %64 = sbr.rel (0) target = $region77
    $region76: #{tpu_custom_call.1} parent=1 // pred_region
      _
    $region77: #{tpu_custom_call.1} parent=1 // pred_fallthru
      _
    // Predicated region
    $region78: #{tpu_custom_call.1} parent=1 // pred_check
      _
    $region79: #{tpu_custom_call.1} parent=1 // pred_check_branch
      %66 = sbr.rel (0) target = $region81
    $region80: #{tpu_custom_call.1} parent=1 // pred_region
      _
    $region81: #{tpu_custom_call.1} parent=1 // pred_fallthru
      _
    // Predicated region
    $region82: #{tpu_custom_call.1} parent=1 // pred_check
      _
    $region83: #{tpu_custom_call.1} parent=1 // pred_check_branch
      %68 = sbr.rel (0) target = $region85
    $region84: #{tpu_custom_call.1} parent=1 // pred_region
      _
    $region85: #{tpu_custom_call.1} parent=1 // pred_fallthru
      _
    %v69 = vld [vmem:[%s0] sm:$0x3]
    %v70 = vld [vmem:[%s1] sm:$0x3]
    %v71 = vld [vmem:[%s4] sm:$0xff]
    %v72 = vld [vmem:[%s4 + $0x8] sm:$0xff]
    %v73 = vadd.f32 %v71, %v72
    %74 = vadd.xlane.f32.xlu0 %v73
    %v75 = vpop.xlane.xlu0 %74
    %v76 = vmul.f32 %v75, 0.00390625
    %v77 = vmul.f32 %v71, %v71
    %v78 = vmul.f32 %v72, %v72
    %v79 = vadd.f32 %v77, %v78
    %80 = vadd.xlane.f32.xlu0 %v79
    %v81 = vpop.xlane.xlu0 %80
    %v82 = vmul.f32 %v81, 0.00390625
    %v83 = vmul.f32 %v76, %v76
    %v84 = vsub.f32 %v82, %v83
    %v85 = vld [vmem:[%s5] sm:$0xff]
    %v86 = vadd.f32 %v84, 1e-05
    %v87 = vrsqrt.pop %v86
    %v88 = vmul.f32 %v85, %v87
    %v89 = vld [vmem:[%s6] sm:$0xff]
    %v90 = vmul.f32 %v76, %v88
    %v91 = vsub.f32 %v89, %v90
    %93 = vset.pattern.permute.xlu0 0
    %94 = vperm.xlu0 %93, %v88
    %v95 = vpop.permute.xlu0 %94
    %v97 = vmul.f32 %v71, %v95
    %v98 = vmul.f32 %v72, %v95
    %100 = vset.pattern.permute.xlu0 0
    %101 = vperm.xlu0 %100, %v91
    %v102 = vpop.permute.xlu0 %101
    %v104 = vadd.f32 %v97, %v102
    %v105 = vadd.f32 %v98, %v102
    %v106 = vmax.f32 %v104, 0.0
    %v107 = vmax.f32 %v105, 0.0
    %v108 = vld [vmem:[%s7] sm:$0xff]
    %v109 = vld [vmem:[%s7 + $0x8] sm:$0xff]
    %110 = vrot.lane.b32.xlu0 %v106, 1
    %v111 = vpop.permute.xlu0 %110
    %112 = vrot.lane.b32.xlu0 %v107, 1
    %v113 = vpop.permute.xlu0 %112
    %v114 = vlaneseq
    %v115 = vand.u32 %v114, 127
    %vm116 = vcmp.lt.s32.totalorder %v115, 1
    %v117 = vsel %vm116, %v111, %v113
    %v118 = vsel %vm116, %v113, %v111
    %v120 = vlaneseq
    %v121 = vshrl.u32 %v120, 7
    %v122 = vsub.s32 0, %v121
    %v123 = vrot.slane %v69, %v122
    %v124 = vlaneseq
    %v125 = vshrl.u32 %v124, 7
    %v126 = vsub.s32 1, %v125
    %v127 = vrot.slane %v69, %v126
    %v130 = vmul.f32 %v118, %v123
    %v131 = vmul.f32 %v117, %v127
    %132 = vrot.lane.b32.xlu0 %v106, 127
    %v133 = vpop.permute.xlu0 %132
    %134 = vrot.lane.b32.xlu0 %v107, 127
    %v135 = vpop.permute.xlu0 %134
    %vm136 = vcmp.lt.s32.totalorder %v115, 127
    %v137 = vsel %vm136, %v133, %v135
    %v138 = vsel %vm136, %v135, %v133
    %v140 = vlaneseq
    %v141 = vshrl.u32 %v140, 7
    %v142 = vsub.s32 0, %v141
    %v143 = vrot.slane %v70, %v142
    %v144 = vlaneseq
    %v145 = vshrl.u32 %v144, 7
    %v146 = vsub.s32 1, %v145
    %v147 = vrot.slane %v70, %v146
    %v150 = vmul.f32 %v137, %v143
    %v151 = vmul.f32 %v138, %v147
    %vm152 = vcmask 195584
    %v154 = vsel %vm152, %v108, 0
    %v157 = vsel %vm152, %v109, 0
    %159 = vmatprep.subr.mxu0 %v131
    %160 = vmatpush1.msra.mxu0 %v130
    %161 = vmatprep.subr.mxu0 %v107
    %162 = vmatpush1.msra.mxu0 %v106
    %163 = vmatprep.subr.mxu0 %v151
    %164 = vmatpush1.msra.mxu0 %v150
    %165 = vmatprep.subr.mxu0 0.0
    %166 = vmatpush1.msra.mxu0 0.0
    %167 = vmatprep.subr.mxu0 0.0
    %168 = vmatpush1.msra.mxu0 0.0
    %169 = vmatprep.subr.mxu0 0.0
    %170 = vmatpush1.msra.mxu0 0.0
    %171 = vmatprep.subr.mxu0 0.0
    %172 = vmatpush1.msra.mxu0 0.0
    %173 = vmatprep.subr.mxu0 0.0
    %174 = vmatpush1.msra.mxu0 0.0
    %175 = vmatprep.subr.mxu0 0.0
    %176 = vmatpush1.msra.mxu0 0.0
    %177 = vmatprep.subr.mxu0 0.0
    %178 = vmatpush1.msra.mxu0 0.0
    %179 = vmatprep.subr.mxu0 0.0
    %180 = vmatpush1.msra.mxu0 0.0
    %181 = vmatprep.subr.mxu0 0.0
    %182 = vmatpush1.msra.mxu0 0.0
    %183 = vmatprep.subr.mxu0 0.0
    %184 = vmatpush1.msra.mxu0 0.0
    %185 = vmatprep.subr.mxu0 0.0
    %186 = vmatpush1.msra.mxu0 0.0
    %187 = vmatprep.subr.mxu0 0.0
    %188 = vmatpush1.msra.mxu0 0.0
    %189 = vmatprep.subr.mxu0 0.0
    %190 = vmatpush1.msra.mxu0 0.0
    %191 = vmatprep.subr.mxu0 0.0
    %192 = vmatpush1.msra.mxu0 0.0
    %193 = vmatprep.subr.mxu0 0.0
    %194 = vmatpush1.msra.mxu0 0.0
    %195 = vmatprep.subr.mxu0 0.0
    %196 = vmatpush1.msra.mxu0 0.0
    %197 = vmatprep.subr.mxu0 0.0
    %198 = vmatpush1.msra.mxu0 0.0
    %199 = vmatprep.subr.mxu0 0.0
    %200 = vmatpush1.msra.mxu0 0.0
    %201 = vmatprep.subr.mxu0 0.0
    %202 = vmatpush1.msra.mxu0 0.0
    %203 = vmatprep.subr.mxu0 0.0
    %204 = vmatpush1.msra.mxu0 0.0
    %205 = vmatprep.subr.mxu0 0.0
    %206 = vmatpush1.msra.mxu0 0.0
    %207 = vmatprep.subr.mxu0 0.0
    %208 = vmatpush1.msra.mxu0 0.0
    %209 = vmatprep.subr.mxu0 0.0
    %210 = vmatpush1.msra.mxu0 0.0
    %211 = vmatprep.subr.mxu0 0.0
    %212 = vmatpush1.msra.mxu0 0.0
    %213 = vmatprep.subr.mxu0 0.0
    %214 = vmatpush1.msra.mxu0 0.0
    %215 = vmatprep.subr.mxu0 0.0
    %216 = vmatpush1.msra.mxu0 0.0
    %217 = vmatprep.subr.mxu0 0.0
    %218 = vmatpush1.msra.mxu0 0.0
    %219 = vmatprep.subr.mxu0 0.0
    %220 = vmatpush1.msra.mxu0 0.0
    %221 = vmatprep.subr.mxu0 0.0
    %222 = vmatpush1.msra.mxu0 0.0
    %223 = vmatprep.mubr.f32.mxu0 0.0
    %224 = vmatmul.mubr.f32.gmra.mrb[0].mxu0 %v154
    %v225 = vpop.f32.mrb[0].mxu0
    %v226 = vadd.f32 0.0, %v225
    %v227 = vpop.f32.mrb[0].mxu0
    %v228 = vadd.f32 0.0, %v227
    %229 = vmatprep.mubr.f32.mxu0 0.0
    %230 = vmatmul.mubr.f32.gmra.mrb[0].mxu0 %v157
    %v231 = vpop.f32.mrb[0].mxu0
    %v232 = vadd.f32 0.0, %v231
    %v233 = vpop.f32.mrb[0].mxu0
    %v234 = vadd.f32 0.0, %v233
    %235 = vdwg.mxu0
    %v236 = vadd.f32 %v226, %v228
    %237 = vadd.xlane.f32.xlu0 %v236
    %v238 = vpop.xlane.xlu0 %237
    %v239 = vadd.f32 %v232, %v234
    %240 = vadd.xlane.f32.xlu0 %v239
    %v241 = vpop.xlane.xlu0 %240
    %v242 = vmul.f32 %v238, 0.00390625
    %v243 = vmul.f32 %v241, 0.00390625
    %v244 = vmul.f32 %v226, %v226
    %v245 = vmul.f32 %v228, %v228
    %v246 = vmul.f32 %v232, %v232
    %v247 = vmul.f32 %v234, %v234
    %v248 = vadd.f32 %v244, %v245
    %249 = vadd.xlane.f32.xlu0 %v248
    %v250 = vpop.xlane.xlu0 %249
    %v251 = vadd.f32 %v246, %v247
    %252 = vadd.xlane.f32.xlu0 %v251
    %v253 = vpop.xlane.xlu0 %252
    %v254 = vmul.f32 %v250, 0.00390625
    %v255 = vmul.f32 %v253, 0.00390625
    %v256 = vmul.f32 %v242, %v242
    %v257 = vmul.f32 %v243, %v243
    %v258 = vsub.f32 %v254, %v256
    %v259 = vsub.f32 %v255, %v257
    %v260 = vld [vmem:[%s8] sm:$0xff]
    %v261 = vld [vmem:[%s8 + $0x8] sm:$0xff]
    %v262 = vadd.f32 %v258, 1e-05
    %v263 = vadd.f32 %v259, 1e-05
    %v264 = vrsqrt.pop %v262
    %v265 = vrsqrt.pop %v263
    %v266 = vmul.f32 %v260, %v264
    %v267 = vmul.f32 %v261, %v265
    %v268 = vld [vmem:[%s9] sm:$0xff]
    %v269 = vld [vmem:[%s9 + $0x8] sm:$0xff]
    %v270 = vmul.f32 %v242, %v266
    %v271 = vmul.f32 %v243, %v267
    %v272 = vsub.f32 %v268, %v270
    %v273 = vsub.f32 %v269, %v271
    %275 = vset.pattern.permute.xlu0 0
    %276 = vperm.xlu0 %275, %v266
    %v277 = vpop.permute.xlu0 %276
    %280 = vset.pattern.permute.xlu0 0
    %281 = vperm.xlu0 %280, %v267
    %v282 = vpop.permute.xlu0 %281
    %v284 = vmul.f32 %v226, %v277
    %v285 = vmul.f32 %v228, %v277
    %v286 = vmul.f32 %v232, %v282
    %v287 = vmul.f32 %v234, %v282
    %289 = vset.pattern.permute.xlu0 0
    %290 = vperm.xlu0 %289, %v272
    %v291 = vpop.permute.xlu0 %290
    %294 = vset.pattern.permute.xlu0 0
    %295 = vperm.xlu0 %294, %v273
    %v296 = vpop.permute.xlu0 %295
    %v298 = vadd.f32 %v284, %v291
    %v299 = vadd.f32 %v285, %v291
    %v300 = vadd.f32 %v286, %v296
    %v301 = vadd.f32 %v287, %v296
    %v302 = vmax.f32 %v298, 0.0
    %v303 = vmax.f32 %v299, 0.0
    %v304 = vmax.f32 %v300, 0.0
    %v305 = vmax.f32 %v301, 0.0
    %v306 = vld [vmem:[%s10] sm:$0xff]
    %v307 = vld [vmem:[%s10 + $0x8] sm:$0xff]
    %308 = vrot.lane.b32.xlu0 %v302, 1
    %v309 = vpop.permute.xlu0 %308
    %310 = vrot.lane.b32.xlu0 %v304, 1
    %v311 = vpop.permute.xlu0 %310
    %312 = vrot.lane.b32.xlu0 %v303, 1
    %v313 = vpop.permute.xlu0 %312
    %314 = vrot.lane.b32.xlu0 %v305, 1
    %v315 = vpop.permute.xlu0 %314
    %v316 = vsel %vm116, %v309, %v313
    %v317 = vsel %vm116, %v311, %v315
    %v318 = vsel %vm116, %v313, %v309
    %v319 = vsel %vm116, %v315, %v311
    %v320 = vmul.f32 %v318, %v123
    %v321 = vmul.f32 %v316, %v127
    %v322 = vmul.f32 %v319, %v123
    %v323 = vmul.f32 %v317, %v127
    %324 = vrot.lane.b32.xlu0 %v302, 127
    %v325 = vpop.permute.xlu0 %324
    %326 = vrot.lane.b32.xlu0 %v304, 127
    %v327 = vpop.permute.xlu0 %326
    %328 = vrot.lane.b32.xlu0 %v303, 127
    %v329 = vpop.permute.xlu0 %328
    %330 = vrot.lane.b32.xlu0 %v305, 127
    %v331 = vpop.permute.xlu0 %330
    %v332 = vsel %vm136, %v325, %v329
    %v333 = vsel %vm136, %v327, %v331
    %v334 = vsel %vm136, %v329, %v325
    %v335 = vsel %vm136, %v331, %v327
    %v336 = vmul.f32 %v332, %v143
    %v337 = vmul.f32 %v334, %v147
    %v338 = vmul.f32 %v333, %v143
    %v339 = vmul.f32 %v335, %v147
    %vm340 = vcmask 392192
    %v342 = vsel %vm340, %v306, 0
    %v345 = vsel %vm340, %v307, 0
    %347 = vmatprep.subr.mxu0 %v321
    %348 = vmatpush1.msra.mxu0 %v320
    %349 = vmatprep.subr.mxu0 %v323
    %350 = vmatpush1.msra.mxu0 %v322
    %351 = vmatprep.subr.mxu0 %v303
    %352 = vmatpush1.msra.mxu0 %v302
    %353 = vmatprep.subr.mxu0 %v305
    %354 = vmatpush1.msra.mxu0 %v304
    %355 = vmatprep.subr.mxu0 %v337
    %356 = vmatpush1.msra.mxu0 %v336
    %357 = vmatprep.subr.mxu0 %v339
    %358 = vmatpush1.msra.mxu0 %v338
    %359 = vmatprep.subr.mxu0 0.0
    %360 = vmatpush1.msra.mxu0 0.0
    %361 = vmatprep.subr.mxu0 0.0
    %362 = vmatpush1.msra.mxu0 0.0
    %363 = vmatprep.subr.mxu0 0.0
    %364 = vmatpush1.msra.mxu0 0.0
    %365 = vmatprep.subr.mxu0 0.0
    %366 = vmatpush1.msra.mxu0 0.0
    %367 = vmatprep.subr.mxu0 0.0
    %368 = vmatpush1.msra.mxu0 0.0
    %369 = vmatprep.subr.mxu0 0.0
    %370 = vmatpush1.msra.mxu0 0.0
    %371 = vmatprep.subr.mxu0 0.0
    %372 = vmatpush1.msra.mxu0 0.0
    %373 = vmatprep.subr.mxu0 0.0
    %374 = vmatpush1.msra.mxu0 0.0
    %375 = vmatprep.subr.mxu0 0.0
    %376 = vmatpush1.msra.mxu0 0.0
    %377 = vmatprep.subr.mxu0 0.0
    %378 = vmatpush1.msra.mxu0 0.0
    %379 = vmatprep.subr.mxu0 0.0
    %380 = vmatpush1.msra.mxu0 0.0
    %381 = vmatprep.subr.mxu0 0.0
    %382 = vmatpush1.msra.mxu0 0.0
    %383 = vmatprep.subr.mxu0 0.0
    %384 = vmatpush1.msra.mxu0 0.0
    %385 = vmatprep.subr.mxu0 0.0
    %386 = vmatpush1.msra.mxu0 0.0
    %387 = vmatprep.subr.mxu0 0.0
    %388 = vmatpush1.msra.mxu0 0.0
    %389 = vmatprep.subr.mxu0 0.0
    %390 = vmatpush1.msra.mxu0 0.0
    %391 = vmatprep.subr.mxu0 0.0
    %392 = vmatpush1.msra.mxu0 0.0
    %393 = vmatprep.subr.mxu0 0.0
    %394 = vmatpush1.msra.mxu0 0.0
    %395 = vmatprep.subr.mxu0 0.0
    %396 = vmatpush1.msra.mxu0 0.0
    %397 = vmatprep.subr.mxu0 0.0
    %398 = vmatpush1.msra.mxu0 0.0
    %399 = vmatprep.subr.mxu0 0.0
    %400 = vmatpush1.msra.mxu0 0.0
    %401 = vmatprep.subr.mxu0 0.0
    %402 = vmatpush1.msra.mxu0 0.0
    %403 = vmatprep.subr.mxu0 0.0
    %404 = vmatpush1.msra.mxu0 0.0
    %405 = vmatprep.subr.mxu0 0.0
    %406 = vmatpush1.msra.mxu0 0.0
    %407 = vmatprep.subr.mxu0 0.0
    %408 = vmatpush1.msra.mxu0 0.0
    %409 = vmatprep.subr.mxu0 0.0
    %410 = vmatpush1.msra.mxu0 0.0
    %411 = vmatprep.mubr.f32.mxu0 0.0
    %412 = vmatmul.mubr.f32.gmra.mrb[0].mxu0 %v342
    %v413 = vpop.f32.mrb[0].mxu0
    %v414 = vadd.f32 0.0, %v413
    %v415 = vpop.f32.mrb[0].mxu0
    %v416 = vadd.f32 0.0, %v415
    %417 = vmatprep.mubr.f32.mxu0 0.0
    %418 = vmatmul.mubr.f32.gmra.mrb[0].mxu0 %v345
    %v419 = vpop.f32.mrb[0].mxu0
    %v420 = vadd.f32 0.0, %v419
    %v421 = vpop.f32.mrb[0].mxu0
    %v422 = vadd.f32 0.0, %v421
    %423 = vdwg.mxu0
    %v424 = vadd.f32 %v414, %v416
    %425 = vadd.xlane.f32.xlu0 %v424
    %v426 = vpop.xlane.xlu0 %425
    %v427 = vadd.f32 %v420, %v422
    %428 = vadd.xlane.f32.xlu0 %v427
    %v429 = vpop.xlane.xlu0 %428
    %v430 = vmul.f32 %v426, 0.00390625
    %v431 = vmul.f32 %v429, 0.00390625
    %v432 = vmul.f32 %v414, %v414
    %v433 = vmul.f32 %v416, %v416
    %v434 = vmul.f32 %v420, %v420
    %v435 = vmul.f32 %v422, %v422
    %v436 = vadd.f32 %v432, %v433
    %437 = vadd.xlane.f32.xlu0 %v436
    %v438 = vpop.xlane.xlu0 %437
    %v439 = vadd.f32 %v434, %v435
    %440 = vadd.xlane.f32.xlu0 %v439
    %v441 = vpop.xlane.xlu0 %440
    %v442 = vmul.f32 %v438, 0.00390625
    %v443 = vmul.f32 %v441, 0.00390625
    %v444 = vmul.f32 %v430, %v430
    %v445 = vmul.f32 %v431, %v431
    %v446 = vsub.f32 %v442, %v444
    %v447 = vsub.f32 %v443, %v445
    %v448 = vld [vmem:[%s11] sm:$0xff]
    %v449 = vld [vmem:[%s11 + $0x8] sm:$0xff]
    %v450 = vadd.f32 %v446, 1e-05
    %v451 = vadd.f32 %v447, 1e-05
    %v452 = vrsqrt.pop %v450
    %v453 = vrsqrt.pop %v451
    %v454 = vmul.f32 %v448, %v452
    %v455 = vmul.f32 %v449, %v453
    %v456 = vld [vmem:[%s12] sm:$0xff]
    %v457 = vld [vmem:[%s12 + $0x8] sm:$0xff]
    %v458 = vmul.f32 %v430, %v454
    %v459 = vmul.f32 %v431, %v455
    %v460 = vsub.f32 %v456, %v458
    %v461 = vsub.f32 %v457, %v459
    %463 = vset.pattern.permute.xlu0 0
    %464 = vperm.xlu0 %463, %v454
    %v465 = vpop.permute.xlu0 %464
    %468 = vset.pattern.permute.xlu0 0
    %469 = vperm.xlu0 %468, %v455
    %v470 = vpop.permute.xlu0 %469
    %v472 = vmul.f32 %v414, %v465
    %v473 = vmul.f32 %v416, %v465
    %v474 = vmul.f32 %v420, %v470
    %v475 = vmul.f32 %v422, %v470
    %477 = vset.pattern.permute.xlu0 0
    %478 = vperm.xlu0 %477, %v460
    %v479 = vpop.permute.xlu0 %478
    %482 = vset.pattern.permute.xlu0 0
    %483 = vperm.xlu0 %482, %v461
    %v484 = vpop.permute.xlu0 %483
    %v486 = vadd.f32 %v472, %v479
    %v487 = vadd.f32 %v473, %v479
    %v488 = vadd.f32 %v474, %v484
    %v489 = vadd.f32 %v475, %v484
    %v490 = vmax.f32 %v486, 0.0
    %v491 = vmax.f32 %v487, 0.0
    %v492 = vmax.f32 %v488, 0.0
    %v493 = vmax.f32 %v489, 0.0
    %v494 = vld [vmem:[%s13] sm:$0xff]
    %v495 = vld [vmem:[%s13 + $0x8] sm:$0xff]
    %496 = vrot.lane.b32.xlu0 %v490, 1
    %v497 = vpop.permute.xlu0 %496
    %498 = vrot.lane.b32.xlu0 %v492, 1
    %v499 = vpop.permute.xlu0 %498
    %500 = vrot.lane.b32.xlu0 %v491, 1
    %v501 = vpop.permute.xlu0 %500
    %502 = vrot.lane.b32.xlu0 %v493, 1
    %v503 = vpop.permute.xlu0 %502
    %v504 = vsel %vm116, %v497, %v501
    %v505 = vsel %vm116, %v499, %v503
    %v506 = vsel %vm116, %v501, %v497
    %v507 = vsel %vm116, %v503, %v499
    %v508 = vmul.f32 %v506, %v123
    %v509 = vmul.f32 %v504, %v127
    %v510 = vmul.f32 %v507, %v123
    %v511 = vmul.f32 %v505, %v127
    %512 = vrot.lane.b32.xlu0 %v490, 127
    %v513 = vpop.permute.xlu0 %512
    %514 = vrot.lane.b32.xlu0 %v492, 127
    %v515 = vpop.permute.xlu0 %514
    %516 = vrot.lane.b32.xlu0 %v491, 127
    %v517 = vpop.permute.xlu0 %516
    %518 = vrot.lane.b32.xlu0 %v493, 127
    %v519 = vpop.permute.xlu0 %518
    %v520 = vsel %vm136, %v513, %v517
    %v521 = vsel %vm136, %v515, %v519
    %v522 = vsel %vm136, %v517, %v513
    %v523 = vsel %vm136, %v519, %v515
    %v524 = vmul.f32 %v520, %v143
    %v525 = vmul.f32 %v522, %v147
    %v526 = vmul.f32 %v521, %v143
    %v527 = vmul.f32 %v523, %v147
    %v528 = vld [vmem:[%s14] sm:$0xff]
    %v529 = vld [vmem:[%s14 + $0x8] sm:$0xff]
    %vm530 = vcmask 64512
    %v532 = vsel %vm530, %v528, 0
    %v535 = vsel %vm530, %v529, 0
    %537 = vmatprep.subr.mxu0 %v72
    %538 = vmatpush1.msra.mxu0 %v71
    %539 = vmatprep.subr.mxu0 0.0
    %540 = vmatpush1.msra.mxu0 0.0
    %541 = vmatprep.subr.mxu0 0.0
    %542 = vmatpush1.msra.mxu0 0.0
    %543 = vmatprep.subr.mxu0 0.0
    %544 = vmatpush1.msra.mxu0 0.0
    %545 = vmatprep.subr.mxu0 0.0
    %546 = vmatpush1.msra.mxu0 0.0
    %547 = vmatprep.subr.mxu0 0.0
    %548 = vmatpush1.msra.mxu0 0.0
    %549 = vmatprep.subr.mxu0 0.0
    %550 = vmatpush1.msra.mxu0 0.0
    %551 = vmatprep.subr.mxu0 0.0
    %552 = vmatpush1.msra.mxu0 0.0
    %553 = vmatprep.subr.mxu0 0.0
    %554 = vmatpush1.msra.mxu0 0.0
    %555 = vmatprep.subr.mxu0 0.0
    %556 = vmatpush1.msra.mxu0 0.0
    %557 = vmatprep.subr.mxu0 0.0
    %558 = vmatpush1.msra.mxu0 0.0
    %559 = vmatprep.subr.mxu0 0.0
    %560 = vmatpush1.msra.mxu0 0.0
    %561 = vmatprep.subr.mxu0 0.0
    %562 = vmatpush1.msra.mxu0 0.0
    %563 = vmatprep.subr.mxu0 0.0
    %564 = vmatpush1.msra.mxu0 0.0
    %565 = vmatprep.subr.mxu0 0.0
    %566 = vmatpush1.msra.mxu0 0.0
    %567 = vmatprep.subr.mxu0 0.0
    %568 = vmatpush1.msra.mxu0 0.0
    %569 = vmatprep.subr.mxu0 0.0
    %570 = vmatpush1.msra.mxu0 0.0
    %571 = vmatprep.subr.mxu0 0.0
    %572 = vmatpush1.msra.mxu0 0.0
    %573 = vmatprep.subr.mxu0 0.0
    %574 = vmatpush1.msra.mxu0 0.0
    %575 = vmatprep.subr.mxu0 0.0
    %576 = vmatpush1.msra.mxu0 0.0
    %577 = vmatprep.subr.mxu0 0.0
    %578 = vmatpush1.msra.mxu0 0.0
    %579 = vmatprep.subr.mxu0 0.0
    %580 = vmatpush1.msra.mxu0 0.0
    %581 = vmatprep.subr.mxu0 0.0
    %582 = vmatpush1.msra.mxu0 0.0
    %583 = vmatprep.subr.mxu0 0.0
    %584 = vmatpush1.msra.mxu0 0.0
    %585 = vmatprep.subr.mxu0 0.0
    %586 = vmatpush1.msra.mxu0 0.0
    %587 = vmatprep.subr.mxu0 0.0
    %588 = vmatpush1.msra.mxu0 0.0
    %589 = vmatprep.subr.mxu0 0.0
    %590 = vmatpush1.msra.mxu0 0.0
    %591 = vmatprep.subr.mxu0 0.0
    %592 = vmatpush1.msra.mxu0 0.0
    %593 = vmatprep.subr.mxu0 0.0
    %594 = vmatpush1.msra.mxu0 0.0
    %595 = vmatprep.subr.mxu0 0.0
    %596 = vmatpush1.msra.mxu0 0.0
    %597 = vmatprep.subr.mxu0 0.0
    %598 = vmatpush1.msra.mxu0 0.0
    %599 = vmatprep.subr.mxu0 0.0
    %600 = vmatpush1.msra.mxu0 0.0
    %601 = vmatprep.mubr.f32.mxu0 0.0
    %602 = vmatmul.mubr.f32.gmra.mrb[0].mxu0 %v532
    %v603 = vpop.f32.mrb[0].mxu0
    %v604 = vadd.f32 0.0, %v603
    %v605 = vpop.f32.mrb[0].mxu0
    %v606 = vadd.f32 0.0, %v605
    %607 = vmatprep.mubr.f32.mxu0 0.0
    %608 = vmatmul.mubr.f32.gmra.mrb[0].mxu0 %v535
    %v609 = vpop.f32.mrb[0].mxu0
    %v610 = vadd.f32 0.0, %v609
    %v611 = vpop.f32.mrb[0].mxu0
    %v612 = vadd.f32 0.0, %v611
    %613 = vdwg.mxu0
    %v614 = vadd.f32 %v604, %v606
    %615 = vadd.xlane.f32.xlu0 %v614
    %v616 = vpop.xlane.xlu0 %615
    %v617 = vadd.f32 %v610, %v612
    %618 = vadd.xlane.f32.xlu0 %v617
    %v619 = vpop.xlane.xlu0 %618
    %v620 = vmul.f32 %v616, 0.00390625
    %v621 = vmul.f32 %v619, 0.00390625
    %v622 = vmul.f32 %v604, %v604
    %v623 = vmul.f32 %v606, %v606
    %v624 = vmul.f32 %v610, %v610
    %v625 = vmul.f32 %v612, %v612
    %v626 = vadd.f32 %v622, %v623
    %627 = vadd.xlane.f32.xlu0 %v626
    %v628 = vpop.xlane.xlu0 %627
    %v629 = vadd.f32 %v624, %v625
    %630 = vadd.xlane.f32.xlu0 %v629
    %v631 = vpop.xlane.xlu0 %630
    %v632 = vmul.f32 %v628, 0.00390625
    %v633 = vmul.f32 %v631, 0.00390625
    %v634 = vmul.f32 %v620, %v620
    %v635 = vmul.f32 %v621, %v621
    %v636 = vsub.f32 %v632, %v634
    %v637 = vsub.f32 %v633, %v635
    %v638 = vld [vmem:[%s15] sm:$0xff]
    %v639 = vld [vmem:[%s15 + $0x8] sm:$0xff]
    %v640 = vadd.f32 %v636, 1e-05
    %v641 = vadd.f32 %v637, 1e-05
    %v642 = vrsqrt.pop %v640
    %v643 = vrsqrt.pop %v641
    %v644 = vmul.f32 %v638, %v642
    %v645 = vmul.f32 %v639, %v643
    %v646 = vld [vmem:[%s16] sm:$0xff]
    %v647 = vld [vmem:[%s16 + $0x8] sm:$0xff]
    %v648 = vmul.f32 %v620, %v644
    %v649 = vmul.f32 %v621, %v645
    %v650 = vsub.f32 %v646, %v648
    %v651 = vsub.f32 %v647, %v649
    %653 = vset.pattern.permute.xlu0 0
    %654 = vperm.xlu0 %653, %v644
    %v655 = vpop.permute.xlu0 %654
    %658 = vset.pattern.permute.xlu0 0
    %659 = vperm.xlu0 %658, %v645
    %v660 = vpop.permute.xlu0 %659
    %v662 = vmul.f32 %v604, %v655
    %v663 = vmul.f32 %v606, %v655
    %v664 = vmul.f32 %v610, %v660
    %v665 = vmul.f32 %v612, %v660
    %667 = vset.pattern.permute.xlu0 0
    %668 = vperm.xlu0 %667, %v650
    %v669 = vpop.permute.xlu0 %668
    %672 = vset.pattern.permute.xlu0 0
    %673 = vperm.xlu0 %672, %v651
    %v674 = vpop.permute.xlu0 %673
    %v676 = vadd.f32 %v662, %v669
    %v677 = vadd.f32 %v663, %v669
    %v678 = vadd.f32 %v664, %v674
    %v679 = vadd.f32 %v665, %v674
    %v681 = vsel %vm340, %v494, 0
    %v684 = vsel %vm340, %v495, 0
    %686 = vmatprep.subr.mxu0 %v509
    %687 = vmatpush1.msra.mxu0 %v508
    %688 = vmatprep.subr.mxu0 %v511
    %689 = vmatpush1.msra.mxu0 %v510
    %690 = vmatprep.subr.mxu0 %v491
    %691 = vmatpush1.msra.mxu0 %v490
    %692 = vmatprep.subr.mxu0 %v493
    %693 = vmatpush1.msra.mxu0 %v492
    %694 = vmatprep.subr.mxu0 %v525
    %695 = vmatpush1.msra.mxu0 %v524
    %696 = vmatprep.subr.mxu0 %v527
    %697 = vmatpush1.msra.mxu0 %v526
    %698 = vmatprep.subr.mxu0 0.0
    %699 = vmatpush1.msra.mxu0 0.0
    %700 = vmatprep.subr.mxu0 0.0
    %701 = vmatpush1.msra.mxu0 0.0
    %702 = vmatprep.subr.mxu0 0.0
    %703 = vmatpush1.msra.mxu0 0.0
    %704 = vmatprep.subr.mxu0 0.0
    %705 = vmatpush1.msra.mxu0 0.0
    %706 = vmatprep.subr.mxu0 0.0
    %707 = vmatpush1.msra.mxu0 0.0
    %708 = vmatprep.subr.mxu0 0.0
    %709 = vmatpush1.msra.mxu0 0.0
    %710 = vmatprep.subr.mxu0 0.0
    %711 = vmatpush1.msra.mxu0 0.0
    %712 = vmatprep.subr.mxu0 0.0
    %713 = vmatpush1.msra.mxu0 0.0
    %714 = vmatprep.subr.mxu0 0.0
    %715 = vmatpush1.msra.mxu0 0.0
    %716 = vmatprep.subr.mxu0 0.0
    %717 = vmatpush1.msra.mxu0 0.0
    %718 = vmatprep.subr.mxu0 0.0
    %719 = vmatpush1.msra.mxu0 0.0
    %720 = vmatprep.subr.mxu0 0.0
    %721 = vmatpush1.msra.mxu0 0.0
    %722 = vmatprep.subr.mxu0 0.0
    %723 = vmatpush1.msra.mxu0 0.0
    %724 = vmatprep.subr.mxu0 0.0
    %725 = vmatpush1.msra.mxu0 0.0
    %726 = vmatprep.subr.mxu0 0.0
    %727 = vmatpush1.msra.mxu0 0.0
    %728 = vmatprep.subr.mxu0 0.0
    %729 = vmatpush1.msra.mxu0 0.0
    %730 = vmatprep.subr.mxu0 0.0
    %731 = vmatpush1.msra.mxu0 0.0
    %732 = vmatprep.subr.mxu0 0.0
    %733 = vmatpush1.msra.mxu0 0.0
    %734 = vmatprep.subr.mxu0 0.0
    %735 = vmatpush1.msra.mxu0 0.0
    %736 = vmatprep.subr.mxu0 0.0
    %737 = vmatpush1.msra.mxu0 0.0
    %738 = vmatprep.subr.mxu0 0.0
    %739 = vmatpush1.msra.mxu0 0.0
    %740 = vmatprep.subr.mxu0 0.0
    %741 = vmatpush1.msra.mxu0 0.0
    %742 = vmatprep.subr.mxu0 0.0
    %743 = vmatpush1.msra.mxu0 0.0
    %744 = vmatprep.subr.mxu0 0.0
    %745 = vmatpush1.msra.mxu0 0.0
    %746 = vmatprep.subr.mxu0 0.0
    %747 = vmatpush1.msra.mxu0 0.0
    %748 = vmatprep.subr.mxu0 0.0
    %749 = vmatpush1.msra.mxu0 0.0
    %750 = vmatprep.mubr.f32.mxu0 0.0
    %751 = vmatmul.mubr.f32.gmra.mrb[0].mxu0 %v681
    %v752 = vpop.f32.mrb[0].mxu0
    %v753 = vadd.f32 %v676, %v752
    %v754 = vpop.f32.mrb[0].mxu0
    %v755 = vadd.f32 %v677, %v754
    %756 = vmatprep.mubr.f32.mxu0 0.0
    %757 = vmatmul.mubr.f32.gmra.mrb[0].mxu0 %v684
    %v758 = vpop.f32.mrb[0].mxu0
    %v759 = vadd.f32 %v678, %v758
    %v760 = vpop.f32.mrb[0].mxu0
    %v761 = vadd.f32 %v679, %v760
    %762 = vdwg.mxu0
    %v763 = vld [vmem:[%s2] sm:$0xff]
    %v764 = vld [vmem:[%s2 + $0x8] sm:$0xff]
    %v765 = vld [vmem:[%s2 + $0x10] sm:$0xff]
    %v766 = vld [vmem:[%s2 + $0x18] sm:$0xff]
    %v767 = vld [vmem:[%s2 + $0x20] sm:$0xff]
    %v768 = vld [vmem:[%s2 + $0x28] sm:$0xff]
    %v769 = vld [vmem:[%s2 + $0x30] sm:$0xff]
    %v770 = vld [vmem:[%s2 + $0x38] sm:$0xff]
    %v771 = vld [vmem:[%s2 + $0x40] sm:$0xff]
    %v772 = vld [vmem:[%s2 + $0x48] sm:$0xff]
    %v773 = vld [vmem:[%s2 + $0x50] sm:$0xff]
    %v774 = vld [vmem:[%s2 + $0x58] sm:$0xff]
    %v775 = vld [vmem:[%s2 + $0x60] sm:$0xff]
    %v776 = vld [vmem:[%s2 + $0x68] sm:$0xff]
    %v777 = vld [vmem:[%s2 + $0x70] sm:$0xff]
    %v778 = vld [vmem:[%s2 + $0x78] sm:$0xff]
    %v779 = vld [vmem:[%s2 + $0x80] sm:$0xff]
    %v780 = vld [vmem:[%s2 + $0x88] sm:$0xff]
    %v781 = vld [vmem:[%s2 + $0x90] sm:$0xff]
    %v782 = vld [vmem:[%s2 + $0x98] sm:$0xff]
    %v783 = vld [vmem:[%s2 + $0xa0] sm:$0xff]
    %v784 = vld [vmem:[%s2 + $0xa8] sm:$0xff]
    %v785 = vld [vmem:[%s2 + $0xb0] sm:$0xff]
    %v786 = vld [vmem:[%s2 + $0xb8] sm:$0xff]
    %v787 = vld [vmem:[%s2 + $0xc0] sm:$0xff]
    %v788 = vld [vmem:[%s2 + $0xc8] sm:$0xff]
    %v789 = vld [vmem:[%s2 + $0xd0] sm:$0xff]
    %v790 = vld [vmem:[%s2 + $0xd8] sm:$0xff]
    %v791 = vld [vmem:[%s2 + $0xe0] sm:$0xff]
    %v792 = vld [vmem:[%s2 + $0xe8] sm:$0xff]
    %v793 = vld [vmem:[%s2 + $0xf0] sm:$0xff]
    %v794 = vld [vmem:[%s2 + $0xf8] sm:$0xff]
    %795 = vmatprep.subr.mxu0 0.0
    %796 = vmatpush1.msra.mxu0 %v763
    %797 = vmatprep.subr.mxu0 0.0
    %798 = vmatpush1.msra.mxu0 %v764
    %799 = vmatprep.subr.mxu0 0.0
    %800 = vmatpush1.msra.mxu0 %v765
    %801 = vmatprep.subr.mxu0 0.0
    %802 = vmatpush1.msra.mxu0 %v766
    %803 = vmatprep.subr.mxu0 0.0
    %804 = vmatpush1.msra.mxu0 %v767
    %805 = vmatprep.subr.mxu0 0.0
    %806 = vmatpush1.msra.mxu0 %v768
    %807 = vmatprep.subr.mxu0 0.0
    %808 = vmatpush1.msra.mxu0 %v769
    %809 = vmatprep.subr.mxu0 0.0
    %810 = vmatpush1.msra.mxu0 %v770
    %811 = vmatprep.subr.mxu0 0.0
    %812 = vmatpush1.msra.mxu0 %v771
    %813 = vmatprep.subr.mxu0 0.0
    %814 = vmatpush1.msra.mxu0 %v772
    %815 = vmatprep.subr.mxu0 0.0
    %816 = vmatpush1.msra.mxu0 %v773
    %817 = vmatprep.subr.mxu0 0.0
    %818 = vmatpush1.msra.mxu0 %v774
    %819 = vmatprep.subr.mxu0 0.0
    %820 = vmatpush1.msra.mxu0 %v775
    %821 = vmatprep.subr.mxu0 0.0
    %822 = vmatpush1.msra.mxu0 %v776
    %823 = vmatprep.subr.mxu0 0.0
    %824 = vmatpush1.msra.mxu0 %v777
    %825 = vmatprep.subr.mxu0 0.0
    %826 = vmatpush1.msra.mxu0 %v778
    %827 = vmatprep.subr.mxu0 0.0
    %828 = vmatpush1.msra.mxu0 %v779
    %829 = vmatprep.subr.mxu0 0.0
    %830 = vmatpush1.msra.mxu0 %v780
    %831 = vmatprep.subr.mxu0 0.0
    %832 = vmatpush1.msra.mxu0 %v781
    %833 = vmatprep.subr.mxu0 0.0
    %834 = vmatpush1.msra.mxu0 %v782
    %835 = vmatprep.subr.mxu0 0.0
    %836 = vmatpush1.msra.mxu0 %v783
    %837 = vmatprep.subr.mxu0 0.0
    %838 = vmatpush1.msra.mxu0 %v784
    %839 = vmatprep.subr.mxu0 0.0
    %840 = vmatpush1.msra.mxu0 %v785
    %841 = vmatprep.subr.mxu0 0.0
    %842 = vmatpush1.msra.mxu0 %v786
    %843 = vmatprep.subr.mxu0 0.0
    %844 = vmatpush1.msra.mxu0 %v787
    %845 = vmatprep.subr.mxu0 0.0
    %846 = vmatpush1.msra.mxu0 %v788
    %847 = vmatprep.subr.mxu0 0.0
    %848 = vmatpush1.msra.mxu0 %v789
    %849 = vmatprep.subr.mxu0 0.0
    %850 = vmatpush1.msra.mxu0 %v790
    %851 = vmatprep.subr.mxu0 0.0
    %852 = vmatpush1.msra.mxu0 %v791
    %853 = vmatprep.subr.mxu0 0.0
    %854 = vmatpush1.msra.mxu0 %v792
    %855 = vmatprep.subr.mxu0 0.0
    %856 = vmatpush1.msra.mxu0 %v793
    %857 = vmatprep.subr.mxu0 0.0
    %858 = vmatpush1.msra.mxu0 %v794
    %859 = vmatprep.mubr.f32.mxu0 %v755
    %860 = vmatmul.mubr.f32.gmra.mrb[0].mxu0 %v753
    %v861 = vpop.f32.mrb[0].mxu0
    %v862 = vadd.f32 0.0, %v861
    %v863 = vpop.f32.mrb[0].mxu0
    %864 = vmatprep.mubr.f32.mxu0 %v761
    %865 = vmatmul.mubr.f32.gmra.mrb[0].mxu0 %v759
    %v866 = vpop.f32.mrb[0].mxu0
    %v867 = vadd.f32 0.0, %v866
    %v868 = vpop.f32.mrb[0].mxu0
    %869 = vdwg.mxu0
    %v870 = vld [vmem:[%s17] sm:$0xf]
    %v871 = vld [vmem:[%s18] sm:$0xf]
    %873 = vset.pattern.permute.xlu0 0
    %874 = vperm.xlu0 %873, %v871
    %v875 = vpop.permute.xlu0 %874
    %vm877 = vcmask 130048
    %v879 = vsel %vm877, %v870, 0
    %881 = vmatprep.subr.mxu0 0.0
    %882 = vmatpush1.msra.mxu0 %v862
    %883 = vmatprep.subr.mxu0 0.0
    %884 = vmatpush1.msra.mxu0 %v867
    %885 = vmatprep.subr.mxu0 0.0
    %886 = vmatpush1.msra.mxu0 0.0
    %887 = vmatprep.subr.mxu0 0.0
    %888 = vmatpush1.msra.mxu0 0.0
    %889 = vmatprep.subr.mxu0 0.0
    %890 = vmatpush1.msra.mxu0 0.0
    %891 = vmatprep.subr.mxu0 0.0
    %892 = vmatpush1.msra.mxu0 0.0
    %893 = vmatprep.subr.mxu0 0.0
    %894 = vmatpush1.msra.mxu0 0.0
    %895 = vmatprep.subr.mxu0 0.0
    %896 = vmatpush1.msra.mxu0 0.0
    %897 = vmatprep.subr.mxu0 0.0
    %898 = vmatpush1.msra.mxu0 0.0
    %899 = vmatprep.subr.mxu0 0.0
    %900 = vmatpush1.msra.mxu0 0.0
    %901 = vmatprep.subr.mxu0 0.0
    %902 = vmatpush1.msra.mxu0 0.0
    %903 = vmatprep.subr.mxu0 0.0
    %904 = vmatpush1.msra.mxu0 0.0
    %905 = vmatprep.subr.mxu0 0.0
    %906 = vmatpush1.msra.mxu0 0.0
    %907 = vmatprep.subr.mxu0 0.0
    %908 = vmatpush1.msra.mxu0 0.0
    %909 = vmatprep.subr.mxu0 0.0
    %910 = vmatpush1.msra.mxu0 0.0
    %911 = vmatprep.subr.mxu0 0.0
    %912 = vmatpush1.msra.mxu0 0.0
    %913 = vmatprep.subr.mxu0 0.0
    %914 = vmatpush1.msra.mxu0 0.0
    %915 = vmatprep.subr.mxu0 0.0
    %916 = vmatpush1.msra.mxu0 0.0
    %917 = vmatprep.subr.mxu0 0.0
    %918 = vmatpush1.msra.mxu0 0.0
    %919 = vmatprep.subr.mxu0 0.0
    %920 = vmatpush1.msra.mxu0 0.0
    %921 = vmatprep.subr.mxu0 0.0
    %922 = vmatpush1.msra.mxu0 0.0
    %923 = vmatprep.subr.mxu0 0.0
    %924 = vmatpush1.msra.mxu0 0.0
    %925 = vmatprep.subr.mxu0 0.0
    %926 = vmatpush1.msra.mxu0 0.0
    %927 = vmatprep.subr.mxu0 0.0
    %928 = vmatpush1.msra.mxu0 0.0
    %929 = vmatprep.subr.mxu0 0.0
    %930 = vmatpush1.msra.mxu0 0.0
    %931 = vmatprep.subr.mxu0 0.0
    %932 = vmatpush1.msra.mxu0 0.0
    %933 = vmatprep.subr.mxu0 0.0
    %934 = vmatpush1.msra.mxu0 0.0
    %935 = vmatprep.subr.mxu0 0.0
    %936 = vmatpush1.msra.mxu0 0.0
    %937 = vmatprep.subr.mxu0 0.0
    %938 = vmatpush1.msra.mxu0 0.0
    %939 = vmatprep.subr.mxu0 0.0
    %940 = vmatpush1.msra.mxu0 0.0
    %941 = vmatprep.subr.mxu0 0.0
    %942 = vmatpush1.msra.mxu0 0.0
    %943 = vmatprep.subr.mxu0 0.0
    %944 = vmatpush1.msra.mxu0 0.0
    %945 = vmatprep.mubr.f32.mxu0 0.0
    %946 = vmatmul.mubr.f32.gmra.mrb[0].mxu0 %v879
    %v947 = vpop.f32.mrb[0].mxu0
    %v948 = vadd.f32 %v875, %v947
    %v949 = vpop.f32.mrb[0].mxu0
    %950 = vdwg.mxu0
    %v951 = vmax.f32 %v948, 0.0
    %v952 = vld [vmem:[%s19] sm:$0xff]
    %v953 = vld [vmem:[%s19 + $0x8] sm:$0xff]
    %v954 = vld [vmem:[%s20] sm:$0xff]
    %v955 = vld [vmem:[%s20 + $0x8] sm:$0xff]
    %957 = vset.pattern.permute.xlu0 0
    %958 = vperm.xlu0 %957, %v954
    %v959 = vpop.permute.xlu0 %958
    %962 = vset.pattern.permute.xlu0 0
    %963 = vperm.xlu0 %962, %v955
    %v964 = vpop.permute.xlu0 %963
    %vm966 = vcmask 31744
    %v968 = vsel %vm966, %v952, 0
    %v971 = vsel %vm966, %v953, 0
    %vm973 = vcmask 1043456
    %v975 = vsel %vm973, %v951, 0
    %977 = vmatprep.subr.mxu0 0.0
    %978 = vmatpush1.msra.mxu0 %v975
    %979 = vmatprep.subr.mxu0 0.0
    %980 = vmatpush1.msra.mxu0 0.0
    %981 = vmatprep.subr.mxu0 0.0
    %982 = vmatpush1.msra.mxu0 0.0
    %983 = vmatprep.subr.mxu0 0.0
    %984 = vmatpush1.msra.mxu0 0.0
    %985 = vmatprep.subr.mxu0 0.0
    %986 = vmatpush1.msra.mxu0 0.0
    %987 = vmatprep.subr.mxu0 0.0
    %988 = vmatpush1.msra.mxu0 0.0
    %989 = vmatprep.subr.mxu0 0.0
    %990 = vmatpush1.msra.mxu0 0.0
    %991 = vmatprep.subr.mxu0 0.0
    %992 = vmatpush1.msra.mxu0 0.0
    %993 = vmatprep.subr.mxu0 0.0
    %994 = vmatpush1.msra.mxu0 0.0
    %995 = vmatprep.subr.mxu0 0.0
    %996 = vmatpush1.msra.mxu0 0.0
    %997 = vmatprep.subr.mxu0 0.0
    %998 = vmatpush1.msra.mxu0 0.0
    %999 = vmatprep.subr.mxu0 0.0
    %1000 = vmatpush1.msra.mxu0 0.0
    %1001 = vmatprep.subr.mxu0 0.0
    %1002 = vmatpush1.msra.mxu0 0.0
    %1003 = vmatprep.subr.mxu0 0.0
    %1004 = vmatpush1.msra.mxu0 0.0
    %1005 = vmatprep.subr.mxu0 0.0
    %1006 = vmatpush1.msra.mxu0 0.0
    %1007 = vmatprep.subr.mxu0 0.0
    %1008 = vmatpush1.msra.mxu0 0.0
    %1009 = vmatprep.subr.mxu0 0.0
    %1010 = vmatpush1.msra.mxu0 0.0
    %1011 = vmatprep.subr.mxu0 0.0
    %1012 = vmatpush1.msra.mxu0 0.0
    %1013 = vmatprep.subr.mxu0 0.0
    %1014 = vmatpush1.msra.mxu0 0.0
    %1015 = vmatprep.subr.mxu0 0.0
    %1016 = vmatpush1.msra.mxu0 0.0
    %1017 = vmatprep.subr.mxu0 0.0
    %1018 = vmatpush1.msra.mxu0 0.0
    %1019 = vmatprep.subr.mxu0 0.0
    %1020 = vmatpush1.msra.mxu0 0.0
    %1021 = vmatprep.subr.mxu0 0.0
    %1022 = vmatpush1.msra.mxu0 0.0
    %1023 = vmatprep.subr.mxu0 0.0
    %1024 = vmatpush1.msra.mxu0 0.0
    %1025 = vmatprep.subr.mxu0 0.0
    %1026 = vmatpush1.msra.mxu0 0.0
    %1027 = vmatprep.subr.mxu0 0.0
    %1028 = vmatpush1.msra.mxu0 0.0
    %1029 = vmatprep.subr.mxu0 0.0
    %1030 = vmatpush1.msra.mxu0 0.0
    %1031 = vmatprep.subr.mxu0 0.0
    %1032 = vmatpush1.msra.mxu0 0.0
    %1033 = vmatprep.subr.mxu0 0.0
    %1034 = vmatpush1.msra.mxu0 0.0
    %1035 = vmatprep.subr.mxu0 0.0
    %1036 = vmatpush1.msra.mxu0 0.0
    %1037 = vmatprep.subr.mxu0 0.0
    %1038 = vmatpush1.msra.mxu0 0.0
    %1039 = vmatprep.subr.mxu0 0.0
    %1040 = vmatpush1.msra.mxu0 0.0
    %1041 = vmatprep.mubr.f32.mxu0 0.0
    %1042 = vmatmul.mubr.f32.gmra.mrb[0].mxu0 %v968
    %v1043 = vpop.f32.mrb[0].mxu0
    %v1044 = vadd.f32 %v959, %v1043
    %v1045 = vpop.f32.mrb[0].mxu0
    %1046 = vmatprep.mubr.f32.mxu0 0.0
    %1047 = vmatmul.mubr.f32.gmra.mrb[0].mxu0 %v971
    %v1048 = vpop.f32.mrb[0].mxu0
    %v1049 = vadd.f32 %v964, %v1048
    %v1050 = vpop.f32.mrb[0].mxu0
    %1051 = vdwg.mxu0
    %v1052 = vsub.f32 0.0, %v1044
    %v1053 = vsub.f32 0.0, %v1049
    %v1054 = vmul.f32 %v1052, 1.442695
    %v1055 = vpow.pop %v1054
    %v1056 = vmul.f32 %v1053, 1.442695
    %v1057 = vpow.pop %v1056
    %v1058 = vadd.f32 %v1055, 1.0
    %v1059 = vadd.f32 %v1057, 1.0
    %v1060 = vrcp.pop %v1058
    %v1061 = vmul.f32 1.0, %v1060
    %v1062 = vrcp.pop %v1059
    %v1063 = vmul.f32 1.0, %v1062
    %v1064 = vld [vmem:[%s3] sm:$0xf]
    %v1067 = vunpack.c.l.s4 1983009808
    %v1068 = vunpack.c.0.s8 %v1067
    %v1069 = vlaneseq
    %v1070 = vshrl.u32 %v1069, 7
    %v1071 = vsub.s32 %v1068, %v1070
    %v1072 = vrot.slane %v1064, %v1071
    %v1073 = vcombine.high %v1072, %v1072
    %vm1074 = vcmask 15360
    %v1076 = vsel %vm1074, %v1061, 0
    %v1079 = vsel %vm1074, %v1063, 0
    %vm1081 = vcmask 1041408
    %v1082 = vsel %vm1081, %v1072, 0
    %v1084 = vsel %vm1081, %v1073, 0
    %1086 = vmatprep.subr.mxu0 %v1084
    %1087 = vmatpush1.msra.mxu0 %v1082
    %1088 = vmatprep.subr.mxu0 0.0
    %1089 = vmatpush1.msra.mxu0 0.0
    %1090 = vmatprep.subr.mxu0 0.0
    %1091 = vmatpush1.msra.mxu0 0.0
    %1092 = vmatprep.subr.mxu0 0.0
    %1093 = vmatpush1.msra.mxu0 0.0
    %1094 = vmatprep.subr.mxu0 0.0
    %1095 = vmatpush1.msra.mxu0 0.0
    %1096 = vmatprep.subr.mxu0 0.0
    %1097 = vmatpush1.msra.mxu0 0.0
    %1098 = vmatprep.subr.mxu0 0.0
    %1099 = vmatpush1.msra.mxu0 0.0
    %1100 = vmatprep.subr.mxu0 0.0
    %1101 = vmatpush1.msra.mxu0 0.0
    %1102 = vmatprep.subr.mxu0 0.0
    %1103 = vmatpush1.msra.mxu0 0.0
    %1104 = vmatprep.subr.mxu0 0.0
    %1105 = vmatpush1.msra.mxu0 0.0
    %1106 = vmatprep.subr.mxu0 0.0
    %1107 = vmatpush1.msra.mxu0 0.0
    %1108 = vmatprep.subr.mxu0 0.0
    %1109 = vmatpush1.msra.mxu0 0.0
    %1110 = vmatprep.subr.mxu0 0.0
    %1111 = vmatpush1.msra.mxu0 0.0
    %1112 = vmatprep.subr.mxu0 0.0
    %1113 = vmatpush1.msra.mxu0 0.0
    %1114 = vmatprep.subr.mxu0 0.0
    %1115 = vmatpush1.msra.mxu0 0.0
    %1116 = vmatprep.subr.mxu0 0.0
    %1117 = vmatpush1.msra.mxu0 0.0
    %1118 = vmatprep.subr.mxu0 0.0
    %1119 = vmatpush1.msra.mxu0 0.0
    %1120 = vmatprep.subr.mxu0 0.0
    %1121 = vmatpush1.msra.mxu0 0.0
    %1122 = vmatprep.subr.mxu0 0.0
    %1123 = vmatpush1.msra.mxu0 0.0
    %1124 = vmatprep.subr.mxu0 0.0
    %1125 = vmatpush1.msra.mxu0 0.0
    %1126 = vmatprep.subr.mxu0 0.0
    %1127 = vmatpush1.msra.mxu0 0.0
    %1128 = vmatprep.subr.mxu0 0.0
    %1129 = vmatpush1.msra.mxu0 0.0
    %1130 = vmatprep.subr.mxu0 0.0
    %1131 = vmatpush1.msra.mxu0 0.0
    %1132 = vmatprep.subr.mxu0 0.0
    %1133 = vmatpush1.msra.mxu0 0.0
    %1134 = vmatprep.subr.mxu0 0.0
    %1135 = vmatpush1.msra.mxu0 0.0
    %1136 = vmatprep.subr.mxu0 0.0
    %1137 = vmatpush1.msra.mxu0 0.0
    %1138 = vmatprep.subr.mxu0 0.0
    %1139 = vmatpush1.msra.mxu0 0.0
    %1140 = vmatprep.subr.mxu0 0.0
    %1141 = vmatpush1.msra.mxu0 0.0
    %1142 = vmatprep.subr.mxu0 0.0
    %1143 = vmatpush1.msra.mxu0 0.0
    %1144 = vmatprep.subr.mxu0 0.0
    %1145 = vmatpush1.msra.mxu0 0.0
    %1146 = vmatprep.subr.mxu0 0.0
    %1147 = vmatpush1.msra.mxu0 0.0
    %1148 = vmatprep.subr.mxu0 0.0
    %1149 = vmatpush1.msra.mxu0 0.0
    %1150 = vmatprep.mubr.f32.mxu0 0.0
    %1151 = vmatmul.mubr.f32.gmra.mrb[0].mxu0 %v1076
    %v1152 = vpop.f32.mrb[0].mxu0
    %v1153 = vadd.f32 0.0, %v1152
    %v1154 = vpop.f32.mrb[0].mxu0
    %v1155 = vadd.f32 0.0, %v1154
    %1156 = vmatprep.mubr.f32.mxu0 0.0
    %1157 = vmatmul.mubr.f32.gmra.mrb[0].mxu0 %v1079
    %v1158 = vpop.f32.mrb[0].mxu0
    %v1159 = vadd.f32 0.0, %v1158
    %v1160 = vpop.f32.mrb[0].mxu0
    %v1161 = vadd.f32 0.0, %v1160
    %1162 = vdwg.mxu0
    %v1163 = vmul.f32 %v753, %v1153
    %v1164 = vmul.f32 %v755, %v1155
    %v1165 = vmul.f32 %v759, %v1159
    %v1166 = vmul.f32 %v761, %v1161
    %v1167 = vadd.f32 %v1163, %v676
    %v1168 = vadd.f32 %v1164, %v677
    %v1169 = vadd.f32 %v1165, %v678
    %v1170 = vadd.f32 %v1166, %v679
    %1171 = vst [vmem:[#allocation2] sm:$0xff] %v1167
    %1172 = vst [vmem:[#allocation2 + $0x8] sm:$0xff] %v1168
    %1173 = vst [vmem:[#allocation2 + $0x10] sm:$0xff] %v1169
    %1174 = vst [vmem:[#allocation2 + $0x18] sm:$0xff] %v1170
    // Predicated region
    $region86: #{tpu_custom_call.1} parent=1 // pred_check
      _
    $region87: #{tpu_custom_call.1} parent=1 // pred_check_branch
      %1176 = sbr.rel (0) target = $region89
    $region88: #{tpu_custom_call.1} parent=1 // pred_region
      %s1178 = ssub.s32 512, 512
      %1179 = vsyncadd [#allocation3], %s1178
      %s1180 = sshll.u32 [#allocation2], 4
      %s1181 = int_to_ptr.vmem [resolvable:$true] %s1180
      %1186 = dma.vmem_to_hbm [thread:$0]  %s1181, 512, %s21, [#allocation3], 256, 256, 16
    $region89: #{tpu_custom_call.1} parent=1 // pred_fallthru
      _
    // Predicated region
    $region90: #{tpu_custom_call.1} parent=1 // pred_check
      _
    $region91: #{tpu_custom_call.1} parent=1 // pred_check_branch
      %1188 = sbr.rel (0) target = $region93
    $region92: #{tpu_custom_call.1} parent=1 // pred_region
      %1189 = dma.done [#allocation3], 512
    $region93: #{tpu_custom_call.1} parent=1 // pred_fallthru
      _
    %1190 = vsyncpa [#allocation3], 1

</llo_original>
